<compile_context>
chip_gen: v7x
topology: tpu7x:2x2x1
jax: 0.10.0
libtpu: 0.0.40
codegen_flags: <defaults>
</compile_context>

<pallas_src>
import jax
import jax.numpy as jnp
from jax.experimental import pallas as pl
from jax.experimental.pallas import tpu as pltpu


# ------------------------------ fused kernel --------------------------------

def _pinsage_fused_kernel(
    feat_ref,            # (n_src0, FEAT) bf16   item float features (gathered)
    idemb_ref,           # (n_src0, H)    f32    id-embedding rows (gathered)
    adj0_ref, adj1_ref,  # MFG weighted adjacencies, bf16
    wslab_ref,           # (FEAT + 6H, H) bf16   [proj_w; Q0; W0; Q1; W1]
    bslab_ref,           # (6, H)         f32    [proj_b; qb0; wb0; qb1; wb1; bias_row]
    eidx_ref,            # (4, E_pad)     int32  [pos_u; pos_v; neg_u; neg_v], pad=-1
    out_ref,             # (1, E_pad)     f32    hinge margins
    zin_ref,             # (n_dst0, 2H)   bf16   scratch for [agg ; h_dst]
):
    f32, bf16 = jnp.float32, jnp.bfloat16
    n_src0, feat_dim = feat_ref.shape
    H = idemb_ref.shape[1]
    n_seed = adj1_ref.shape[0]
    e_pad = eidx_ref.shape[1]

    # ---- static slices into the packed weight / bias slabs ------------------
    o = 0
    proj_w = wslab_ref[o:o + feat_dim, :]; o += feat_dim
    qw0 = wslab_ref[o:o + H, :];           o += H
    w0 = wslab_ref[o:o + 2 * H, :];        o += 2 * H
    qw1 = wslab_ref[o:o + H, :];           o += H
    w1 = wslab_ref[o:o + 2 * H, :]

    proj_b = bslab_ref[0:1, :]
    qb0 = bslab_ref[1:2, :]
    wb0 = bslab_ref[2:3, :]
    qb1 = bslab_ref[3:4, :]
    wb1 = bslab_ref[4:5, :]
    bias_row = bslab_ref[5:6, :n_seed]      # scorer bias over seed items

    # ---- LinearProjector: id-embedding + Linear(float feats) ----------------
    # (bf16 MXU operands, f32 accumulation; epilogue stays in f32)
    h = (jnp.dot(feat_ref[...], proj_w, preferred_element_type=f32)
         + proj_b + idemb_ref[...])                     # (n_src0, H) f32
    # Hoist the seed prefix and the single bf16 cast so the full f32 h is dead
    # after conv-0 (shrinks its live range / VMEM footprint).
    h_prefix = h[:n_seed]                               # (n_seed, H) f32
    h_bf = h.astype(bf16)

    # ---- WeightedSAGEConv (dropout = identity in eval mode) -----------------
    def conv(h_src_bf, adj_bf, qw, qb, w, wb):
        n_dst, n_src = adj_bf.shape
        # n = relu(Q h_src)
        n = jnp.maximum(
            jnp.dot(h_src_bf, qw, preferred_element_type=f32) + qb, 0.0)
        # message sum A @ n and neighbor weight-sum A @ 1 -- both on the MXU
        agg = jnp.dot(adj_bf, n.astype(bf16), preferred_element_type=f32)
        ws = jnp.dot(adj_bf, jnp.ones((n_src, 1), bf16), preferred_element_type=f32)
        ws = jnp.maximum(ws, 1.0)
        agg = agg * pl.reciprocal(ws, approx=True)      # EUP, off the VALU path
        # z = relu(W [agg/ws ; h_dst]) with W = [W1; W2] fused -> one K=2H matmul.
        # Stage the concat into bf16 VMEM scratch (no lane-axis concatenate temp).
        zin_ref[:n_dst, :H] = agg.astype(bf16)
        zin_ref[:n_dst, H:2 * H] = h_src_bf[:n_dst]     # dst nodes = prefix of src
        z = jnp.maximum(
            jnp.dot(zin_ref[:n_dst, :], w, preferred_element_type=f32) + wb, 0.0)
        # z / max(||z||_2, guard)  via rsqrt (EUP) with zero-norm guard
        ss = jnp.sum(z * z, axis=1, keepdims=True)
        inv = jnp.where(ss == 0.0, 1.0, jax.lax.rsqrt(ss))
        return z * inv

    h1 = conv(h_bf, adj0_ref[...], qw0, qb0, w0, wb0)
    h2 = conv(h1.astype(bf16), adj1_ref[...], qw1, qb1, w1, wb1)

    # h_item_dst + SAGENet(blocks, h_item): dst of last block is a prefix of src0.
    h_seed_bf = (h_prefix + h2).astype(bf16)            # (n_seed, H)

    # ---- ItemToItemScorer + hinge margin, lane-dense (1, E_pad) output ------
    # M[a, b] = <h_a, h_b> over seed items (contract the feature axis on the MXU).
    M_bf = jax.lax.dot_general(h_seed_bf, h_seed_bf, (((1,), (1,)), ((), ())),
                               preferred_element_type=f32).astype(bf16)
    bias_bf = bias_row.astype(bf16)
    ones_seed = jnp.ones((1, n_seed), bf16)
    # one-hot selection matrices built in-kernel from the raw edge indices
    row_iota = jax.lax.broadcasted_iota(jnp.int32, (n_seed, e_pad), 0)

    def edge_scores(u_idx, v_idx):
        # score[e] = M[u_e, v_e] + bias[u_e] + bias[v_e], as a lane-dense (1, E_pad)
        # row: gather via one-hot matmuls, reduce via a (1, n_seed) ones matmul.
        su = (row_iota == u_idx).astype(bf16)            # exact 0/1 in bf16
        sv = (row_iota == v_idx).astype(bf16)
        gathered = jnp.dot(M_bf, sv, preferred_element_type=f32)
        dots = jnp.dot(ones_seed, su * gathered.astype(bf16),
                       preferred_element_type=f32)
        biases = jnp.dot(bias_bf, su + sv, preferred_element_type=f32)
        return dots + biases

    u_p = eidx_ref[0:1, :]
    pos = edge_scores(u_p, eidx_ref[1:2, :])
    neg = edge_scores(eidx_ref[2:3, :], eidx_ref[3:4, :])

    margin = jnp.maximum(neg - pos + 1.0, 0.0)
    # mask padded edge lanes (index == -1) to 0 so any future reduction over the
    # full (1, E_pad) row stays correct; unmasked lane-dense vst (E_pad % 128 == 0)
    out_ref[...] = jnp.where(u_p >= 0, margin, 0.0)


# ------------------------------ model wrapper --------------------------------

def pinsage_forward(params, node_feat, blocks, pos_edges, neg_edges, e_pad=128):
    """Full PinSAGEModel.forward as a single fused pallas_call."""
    bf16, f32 = jnp.bfloat16, jnp.float32
    src0 = blocks[0]["src_nids"]        # 2-hop neighborhood node ids
    dst_last = blocks[-1]["dst_nids"]   # seed (output) item ids
    n_seed = dst_last.shape[0]
    n_edges = pos_edges[0].shape[0]
    H = params["proj_b"].shape[1]
    n_dst0 = blocks[0]["adj"].shape[0]

    # Host-side row gathers (tiny, fused by XLA); everything downstream is in-kernel.
    # MXU-only operands are pre-cast to bf16 here -> half the HBM->VMEM bytes and
    # no in-kernel f32->bf16 pack ops.
    # TODO(synk): at production batch sizes, move these gathers into the kernel via
    # PrefetchScalarGridSpec row-gather index_maps and tile the projector/conv-0
    # over dst rows with a 'parallel' grid axis (dual-TC v7x), budgeting tiles
    # against 64 MiB physical VMEM on v7x (vs 128 MiB on v5e/v6e).
    feat_src = node_feat[src0].astype(bf16)
    idemb_src = params["id_emb"][src0]                   # f32 (epilogue add)

    # Packed bf16 weight slab: [proj_w; Q0; W0; Q1; W1]  (fewer, larger entry DMAs)
    (qw0, qb0, w0, wb0), (qw1, qb1, w1, wb1) = params["convs"]
    w_slab = jnp.concatenate(
        [params["proj_w"], qw0, w0, qw1, w1], axis=0).astype(bf16)

    # Packed f32 bias slab: [proj_b; qb0; wb0; qb1; wb1; scorer-bias row (H-padded)]
    bias_row = jnp.zeros((1, H), f32).at[0, :n_seed].set(
        params["scorer_bias"][dst_last])
    b_slab = jnp.concatenate([params["proj_b"], qb0, wb0, qb1, wb1, bias_row],
                             axis=0)

    # Packed edge-index slab (4, e_pad): [pos_u; pos_v; neg_u; neg_v], pad = -1.
    def pad_idx(idx):
        return jnp.full((e_pad,), -1, jnp.int32).at[:idx.shape[0]].set(
            idx.astype(jnp.int32))
    edge_idx = jnp.stack([pad_idx(pos_edges[0]), pad_idx(pos_edges[1]),
                          pad_idx(neg_edges[0]), pad_idx(neg_edges[1])], axis=0)

    args = [
        feat_src, idemb_src,
        blocks[0]["adj"].astype(bf16), blocks[1]["adj"].astype(bf16),
        w_slab, b_slab, edge_idx,
    ]

    out = pl.pallas_call(
        _pinsage_fused_kernel,
        out_shape=jax.ShapeDtypeStruct((1, e_pad), jnp.float32),
        in_specs=[pl.BlockSpec(memory_space=pltpu.MemorySpace.VMEM)] * len(args),
        out_specs=pl.BlockSpec(memory_space=pltpu.MemorySpace.VMEM),
        scratch_shapes=[pltpu.VMEM((n_dst0, 2 * H), bf16)],
    )(*args)
    return out[0, :n_edges]


pinsage_forward_jit = jax.jit(pinsage_forward, static_argnames=("e_pad",))


# ----------------------------------- main ------------------------------------

if __name__ == "__main__":
    key = jax.random.PRNGKey(0)

    N_NODES = 256       # full_graph.number_of_nodes(ntype)
    FEAT = 128          # dense item-feature width fed to LinearProjector
    HIDDEN = 128        # hidden_dims (padded to a full 128-lane vreg width)
    N_LAYERS = 2        # n_layers
    N0_SRC, N0_DST, N1_DST = 128, 64, 32   # 2-hop / 1-hop / seed node counts
    E = 32              # edges in pos_graph and neg_graph
    E_PAD = 128         # lane-dense padded edge axis for the margin output

    ks = jax.random.split(key, 16)

    # --- parameters (deterministic init) ---
    # TODO(synk): categorical / bag-of-words textual embedding sub-modules of
    # LinearProjector are not modeled; only id-embedding + Linear(float feats).
    params = {
        "proj_w": jax.random.normal(ks[0], (FEAT, HIDDEN), jnp.float32) * 0.1,
        "proj_b": jax.random.normal(ks[1], (1, HIDDEN), jnp.float32) * 0.1,
        "id_emb": jax.random.normal(ks[2], (N_NODES, HIDDEN), jnp.float32) * 0.1,
        "scorer_bias": jax.random.normal(ks[3], (N_NODES,), jnp.float32) * 0.01,
        "convs": [],
    }
    for layer in range(N_LAYERS):
        kq, kqb, kw, kwb = jax.random.split(ks[4 + layer], 4)
        params["convs"].append((
            jax.random.normal(kq, (HIDDEN, HIDDEN), jnp.float32) * 0.1,       # Q.weight.T
            jax.random.normal(kqb, (1, HIDDEN), jnp.float32) * 0.1,           # Q.bias
            jax.random.normal(kw, (2 * HIDDEN, HIDDEN), jnp.float32) * 0.1,   # [W1; W2].T fused
            jax.random.normal(kwb, (1, HIDDEN), jnp.float32) * 0.1,           # W.bias
        ))

    # --- synthetic graph data ---
    node_feat = jax.random.normal(ks[8], (N_NODES, FEAT), jnp.float32)

    # node-id sets for the message-flow blocks (dst nodes are a prefix of src nodes)
    src0 = jax.random.permutation(ks[9], jnp.arange(N_NODES, dtype=jnp.int32))[:N0_SRC]
    dst0 = src0[:N0_DST]
    dst1 = dst0[:N1_DST]
    # The h_item_dst == h_item[:n_seed] slice relies on this prefix property:
    assert bool(jnp.all(dst0 == src0[:N0_DST]))
    assert bool(jnp.all(dst1 == src0[:N1_DST]))

    # dense weighted adjacencies (edge weights are nonnegative visit counts)
    adj0 = jax.random.randint(ks[10], (N0_DST, N0_SRC), 0, 4).astype(jnp.float32)
    adj1 = jax.random.randint(ks[11], (N1_DST, N0_DST), 0, 4).astype(jnp.float32)
    # TODO(synk): at production sizes, pad adj1's contraction dim (N0_DST) to a
    # multiple of 128 so every matmul is a full-width MXU pass.

    blocks = [
        {"adj": adj0, "src_nids": src0, "dst_nids": dst0},
        {"adj": adj1, "src_nids": dst0, "dst_nids": dst1},
    ]

    # pos / neg item-item graphs over the seed nodes (same #edges, as in PinSAGE)
    pos_src = jax.random.randint(ks[12], (E,), 0, N1_DST, jnp.int32)
    pos_dst = jax.random.randint(ks[13], (E,), 0, N1_DST, jnp.int32)
    neg_src = pos_src
    neg_dst = jax.random.randint(ks[14], (E,), 0, N1_DST, jnp.int32)

    out = pinsage_forward_jit(params, node_feat, blocks,
                              (pos_src, pos_dst), (neg_src, neg_dst), e_pad=E_PAD)
    out = jax.block_until_ready(out)
    assert out.shape == (E,) and out.dtype == jnp.float32
    assert bool(jnp.all(out >= 0.0))
    assert bool(jnp.all(jnp.isfinite(out)))
    print("KERNEL_OK")
</pallas_src>

<mosaic_0001>
module attributes {stable_mosaic.version = 11 : i64} {
  func.func @_pinsage_fused_kernel(%arg0: memref<128x128xbf16, #tpu.memory_space<vmem>>, %arg1: memref<128x128xf32, #tpu.memory_space<vmem>>, %arg2: memref<64x128xbf16, #tpu.memory_space<vmem>>, %arg3: memref<32x64xbf16, #tpu.memory_space<vmem>>, %arg4: memref<896x128xbf16, #tpu.memory_space<vmem>>, %arg5: memref<6x128xf32, #tpu.memory_space<vmem>>, %arg6: memref<4x128xi32, #tpu.memory_space<vmem>>, %arg7: memref<1x128xf32, #tpu.memory_space<vmem>>, %arg8: memref<64x256xbf16, #tpu.memory_space<vmem>>) attributes {dimension_semantics = [], scalar_prefetch = 0 : i64, scratch_operands = 1 : i64, tpu.core_type = #tpu.core_type<tc>} {
    %c0 = arith.constant 0 : index
    %c0_0 = arith.constant 0 : index
    %0 = vector.load %arg4[%c0, %c0_0] : memref<896x128xbf16, #tpu.memory_space<vmem>>, vector<128x128xbf16>
    %c128 = arith.constant 128 : index
    %c0_1 = arith.constant 0 : index
    %1 = vector.load %arg4[%c128, %c0_1] : memref<896x128xbf16, #tpu.memory_space<vmem>>, vector<128x128xbf16>
    %c256 = arith.constant 256 : index
    %c0_2 = arith.constant 0 : index
    %2 = vector.load %arg4[%c256, %c0_2] : memref<896x128xbf16, #tpu.memory_space<vmem>>, vector<256x128xbf16>
    %c512 = arith.constant 512 : index
    %c0_3 = arith.constant 0 : index
    %3 = vector.load %arg4[%c512, %c0_3] : memref<896x128xbf16, #tpu.memory_space<vmem>>, vector<128x128xbf16>
    %c640 = arith.constant 640 : index
    %c0_4 = arith.constant 0 : index
    %4 = vector.load %arg4[%c640, %c0_4] : memref<896x128xbf16, #tpu.memory_space<vmem>>, vector<256x128xbf16>
    %c0_5 = arith.constant 0 : index
    %c0_6 = arith.constant 0 : index
    %5 = vector.load %arg5[%c0_5, %c0_6] : memref<6x128xf32, #tpu.memory_space<vmem>>, vector<1x128xf32>
    %c1 = arith.constant 1 : index
    %c0_7 = arith.constant 0 : index
    %6 = vector.load %arg5[%c1, %c0_7] : memref<6x128xf32, #tpu.memory_space<vmem>>, vector<1x128xf32>
    %c2 = arith.constant 2 : index
    %c0_8 = arith.constant 0 : index
    %7 = vector.load %arg5[%c2, %c0_8] : memref<6x128xf32, #tpu.memory_space<vmem>>, vector<1x128xf32>
    %c3 = arith.constant 3 : index
    %c0_9 = arith.constant 0 : index
    %8 = vector.load %arg5[%c3, %c0_9] : memref<6x128xf32, #tpu.memory_space<vmem>>, vector<1x128xf32>
    %c4 = arith.constant 4 : index
    %c0_10 = arith.constant 0 : index
    %9 = vector.load %arg5[%c4, %c0_10] : memref<6x128xf32, #tpu.memory_space<vmem>>, vector<1x128xf32>
    %c5 = arith.constant 5 : index
    %c0_11 = arith.constant 0 : index
    %10 = vector.load %arg5[%c5, %c0_11] : memref<6x128xf32, #tpu.memory_space<vmem>>, vector<1x32xf32>
    %c0_12 = arith.constant 0 : index
    %c0_13 = arith.constant 0 : index
    %11 = vector.load %arg0[%c0_12, %c0_13] : memref<128x128xbf16, #tpu.memory_space<vmem>>, vector<128x128xbf16>
    %cst = arith.constant dense<0.000000e+00> : vector<128x128xf32>
    %12 = tpu.matmul %11, %0, %cst {dimension_numbers = #tpu.dot_dimension_numbers<[1], [0], [0], [1], [0, 0, 1, 1], [], []>} : vector<128x128xbf16>, vector<128x128xbf16>, vector<128x128xf32> -> vector<128x128xf32>
    %13 = vector.broadcast %5 : vector<1x128xf32> to vector<128x128xf32>
    %14 = arith.addf %12, %13 : vector<128x128xf32>
    %c0_14 = arith.constant 0 : index
    %c0_15 = arith.constant 0 : index
    %15 = vector.load %arg1[%c0_14, %c0_15] : memref<128x128xf32, #tpu.memory_space<vmem>>, vector<128x128xf32>
    %16 = arith.addf %14, %15 : vector<128x128xf32>
    %17 = vector.extract_strided_slice %16 {offsets = [0, 0], sizes = [32, 128], strides = [1, 1]} : vector<128x128xf32> to vector<32x128xf32>
    %18 = arith.truncf %16 : vector<128x128xf32> to vector<128x128xbf16>
    %c0_16 = arith.constant 0 : index
    %c0_17 = arith.constant 0 : index
    %19 = vector.load %arg2[%c0_16, %c0_17] : memref<64x128xbf16, #tpu.memory_space<vmem>>, vector<64x128xbf16>
    %cst_18 = arith.constant dense<0.000000e+00> : vector<128x128xf32>
    %20 = tpu.matmul %18, %1, %cst_18 {dimension_numbers = #tpu.dot_dimension_numbers<[1], [0], [0], [1], [0, 0, 1, 1], [], []>} : vector<128x128xbf16>, vector<128x128xbf16>, vector<128x128xf32> -> vector<128x128xf32>
    %21 = vector.broadcast %6 : vector<1x128xf32> to vector<128x128xf32>
    %22 = arith.addf %20, %21 : vector<128x128xf32>
    %cst_19 = arith.constant 0.000000e+00 : f32
    %23 = vector.broadcast %cst_19 : f32 to vector<128x128xf32>
    %24 = arith.maximumf %22, %23 : vector<128x128xf32>
    %25 = arith.truncf %24 : vector<128x128xf32> to vector<128x128xbf16>
    %cst_20 = arith.constant dense<0.000000e+00> : vector<64x128xf32>
    %26 = tpu.matmul %19, %25, %cst_20 {dimension_numbers = #tpu.dot_dimension_numbers<[1], [0], [0], [1], [0, 0, 1, 1], [], []>} : vector<64x128xbf16>, vector<128x128xbf16>, vector<64x128xf32> -> vector<64x128xf32>
    %cst_21 = arith.constant 1.000000e+00 : bf16
    %27 = vector.broadcast %cst_21 : bf16 to vector<128x1xbf16>
    %cst_22 = arith.constant dense<0.000000e+00> : vector<64x1xf32>
    %28 = tpu.matmul %19, %27, %cst_22 {dimension_numbers = #tpu.dot_dimension_numbers<[1], [0], [0], [1], [0, 0, 1, 1], [], []>} : vector<64x128xbf16>, vector<128x1xbf16>, vector<64x1xf32> -> vector<64x1xf32>
    %cst_23 = arith.constant 1.000000e+00 : f32
    %29 = vector.broadcast %cst_23 : f32 to vector<64x1xf32>
    %30 = arith.maximumf %28, %29 : vector<64x1xf32>
    %31 = tpu.reciprocal %30 {approx = true} : vector<64x1xf32> -> vector<64x1xf32>
    %32 = vector.broadcast %31 : vector<64x1xf32> to vector<64x128xf32>
    %33 = arith.mulf %26, %32 : vector<64x128xf32>
    %34 = arith.truncf %33 : vector<64x128xf32> to vector<64x128xbf16>
    %c0_24 = arith.constant 0 : index
    %c0_25 = arith.constant 0 : index
    %35 = vector.load %arg8[%c0_24, %c0_25] : memref<64x256xbf16, #tpu.memory_space<vmem>>, vector<64x128xbf16>
    tpu.vector_store %arg8[%c0_24, %c0_25], %34 {strides = array<i32>} : memref<64x256xbf16, #tpu.memory_space<vmem>>, vector<64x128xbf16>,
    %36 = vector.extract_strided_slice %18 {offsets = [0, 0], sizes = [64, 128], strides = [1, 1]} : vector<128x128xbf16> to vector<64x128xbf16>
    %c0_26 = arith.constant 0 : index
    %c128_27 = arith.constant 128 : index
    %37 = vector.load %arg8[%c0_26, %c128_27] : memref<64x256xbf16, #tpu.memory_space<vmem>>, vector<64x128xbf16>
    tpu.vector_store %arg8[%c0_26, %c128_27], %36 {strides = array<i32>} : memref<64x256xbf16, #tpu.memory_space<vmem>>, vector<64x128xbf16>,
    %c0_28 = arith.constant 0 : index
    %c0_29 = arith.constant 0 : index
    %38 = vector.load %arg8[%c0_28, %c0_29] : memref<64x256xbf16, #tpu.memory_space<vmem>>, vector<64x256xbf16>
    %cst_30 = arith.constant dense<0.000000e+00> : vector<64x128xf32>
    %39 = tpu.matmul %38, %2, %cst_30 {dimension_numbers = #tpu.dot_dimension_numbers<[1], [0], [0], [1], [0, 0, 1, 1], [], []>} : vector<64x256xbf16>, vector<256x128xbf16>, vector<64x128xf32> -> vector<64x128xf32>
    %40 = vector.broadcast %7 : vector<1x128xf32> to vector<64x128xf32>
    %41 = arith.addf %39, %40 : vector<64x128xf32>
    %cst_31 = arith.constant 0.000000e+00 : f32
    %42 = vector.broadcast %cst_31 : f32 to vector<64x128xf32>
    %43 = arith.maximumf %41, %42 : vector<64x128xf32>
    %44 = arith.mulf %43, %43 : vector<64x128xf32>
    %cst_32 = arith.constant dense<0.000000e+00> : vector<64xf32>
    %45 = vector.multi_reduction <add>, %44, %cst_32 [1] : vector<64x128xf32> to vector<64xf32>
    %46 = vector.shape_cast %45 : vector<64xf32> to vector<64x1xf32>
    %cst_33 = arith.constant 0.000000e+00 : f32
    %47 = vector.broadcast %cst_33 : f32 to vector<64x1xf32>
    %48 = arith.cmpf oeq, %46, %47 : vector<64x1xf32>
    %49 = math.rsqrt %46 : vector<64x1xf32>
    %cst_34 = arith.constant 1.000000e+00 : f32
    %50 = vector.broadcast %cst_34 : f32 to vector<64x1xf32>
    %51 = arith.select %48, %50, %49 : vector<64x1xi1>, vector<64x1xf32>
    %52 = vector.broadcast %51 : vector<64x1xf32> to vector<64x128xf32>
    %53 = arith.mulf %43, %52 : vector<64x128xf32>
    %54 = arith.truncf %53 : vector<64x128xf32> to vector<64x128xbf16>
    %c0_35 = arith.constant 0 : index
    %c0_36 = arith.constant 0 : index
    %55 = vector.load %arg3[%c0_35, %c0_36] : memref<32x64xbf16, #tpu.memory_space<vmem>>, vector<32x64xbf16>
    %cst_37 = arith.constant dense<0.000000e+00> : vector<64x128xf32>
    %56 = tpu.matmul %54, %3, %cst_37 {dimension_numbers = #tpu.dot_dimension_numbers<[1], [0], [0], [1], [0, 0, 1, 1], [], []>} : vector<64x128xbf16>, vector<128x128xbf16>, vector<64x128xf32> -> vector<64x128xf32>
    %57 = vector.broadcast %8 : vector<1x128xf32> to vector<64x128xf32>
    %58 = arith.addf %56, %57 : vector<64x128xf32>
    %cst_38 = arith.constant 0.000000e+00 : f32
    %59 = vector.broadcast %cst_38 : f32 to vector<64x128xf32>
    %60 = arith.maximumf %58, %59 : vector<64x128xf32>
    %61 = arith.truncf %60 : vector<64x128xf32> to vector<64x128xbf16>
    %cst_39 = arith.constant dense<0.000000e+00> : vector<32x128xf32>
    %62 = tpu.matmul %55, %61, %cst_39 {dimension_numbers = #tpu.dot_dimension_numbers<[1], [0], [0], [1], [0, 0, 1, 1], [], []>} : vector<32x64xbf16>, vector<64x128xbf16>, vector<32x128xf32> -> vector<32x128xf32>
    %cst_40 = arith.constant 1.000000e+00 : bf16
    %63 = vector.broadcast %cst_40 : bf16 to vector<64x1xbf16>
    %cst_41 = arith.constant dense<0.000000e+00> : vector<32x1xf32>
    %64 = tpu.matmul %55, %63, %cst_41 {dimension_numbers = #tpu.dot_dimension_numbers<[1], [0], [0], [1], [0, 0, 1, 1], [], []>} : vector<32x64xbf16>, vector<64x1xbf16>, vector<32x1xf32> -> vector<32x1xf32>
    %cst_42 = arith.constant 1.000000e+00 : f32
    %65 = vector.broadcast %cst_42 : f32 to vector<32x1xf32>
    %66 = arith.maximumf %64, %65 : vector<32x1xf32>
    %67 = tpu.reciprocal %66 {approx = true} : vector<32x1xf32> -> vector<32x1xf32>
    %68 = vector.broadcast %67 : vector<32x1xf32> to vector<32x128xf32>
    %69 = arith.mulf %62, %68 : vector<32x128xf32>
    %70 = arith.truncf %69 : vector<32x128xf32> to vector<32x128xbf16>
    %c0_43 = arith.constant 0 : index
    %c0_44 = arith.constant 0 : index
    %71 = vector.load %arg8[%c0_43, %c0_44] : memref<64x256xbf16, #tpu.memory_space<vmem>>, vector<32x128xbf16>
    tpu.vector_store %arg8[%c0_43, %c0_44], %70 {strides = array<i32>} : memref<64x256xbf16, #tpu.memory_space<vmem>>, vector<32x128xbf16>,
    %72 = vector.extract_strided_slice %54 {offsets = [0, 0], sizes = [32, 128], strides = [1, 1]} : vector<64x128xbf16> to vector<32x128xbf16>
    %c0_45 = arith.constant 0 : index
    %c128_46 = arith.constant 128 : index
    %73 = vector.load %arg8[%c0_45, %c128_46] : memref<64x256xbf16, #tpu.memory_space<vmem>>, vector<32x128xbf16>
    tpu.vector_store %arg8[%c0_45, %c128_46], %72 {strides = array<i32>} : memref<64x256xbf16, #tpu.memory_space<vmem>>, vector<32x128xbf16>,
    %c0_47 = arith.constant 0 : index
    %c0_48 = arith.constant 0 : index
    %74 = vector.load %arg8[%c0_47, %c0_48] : memref<64x256xbf16, #tpu.memory_space<vmem>>, vector<32x256xbf16>
    %cst_49 = arith.constant dense<0.000000e+00> : vector<32x128xf32>
    %75 = tpu.matmul %74, %4, %cst_49 {dimension_numbers = #tpu.dot_dimension_numbers<[1], [0], [0], [1], [0, 0, 1, 1], [], []>} : vector<32x256xbf16>, vector<256x128xbf16>, vector<32x128xf32> -> vector<32x128xf32>
    %76 = vector.broadcast %9 : vector<1x128xf32> to vector<32x128xf32>
    %77 = arith.addf %75, %76 : vector<32x128xf32>
    %cst_50 = arith.constant 0.000000e+00 : f32
    %78 = vector.broadcast %cst_50 : f32 to vector<32x128xf32>
    %79 = arith.maximumf %77, %78 : vector<32x128xf32>
    %80 = arith.mulf %79, %79 : vector<32x128xf32>
    %cst_51 = arith.constant dense<0.000000e+00> : vector<32xf32>
    %81 = vector.multi_reduction <add>, %80, %cst_51 [1] : vector<32x128xf32> to vector<32xf32>
    %82 = vector.shape_cast %81 : vector<32xf32> to vector<32x1xf32>
    %cst_52 = arith.constant 0.000000e+00 : f32
    %83 = vector.broadcast %cst_52 : f32 to vector<32x1xf32>
    %84 = arith.cmpf oeq, %82, %83 : vector<32x1xf32>
    %85 = math.rsqrt %82 : vector<32x1xf32>
    %cst_53 = arith.constant 1.000000e+00 : f32
    %86 = vector.broadcast %cst_53 : f32 to vector<32x1xf32>
    %87 = arith.select %84, %86, %85 : vector<32x1xi1>, vector<32x1xf32>
    %88 = vector.broadcast %87 : vector<32x1xf32> to vector<32x128xf32>
    %89 = arith.mulf %79, %88 : vector<32x128xf32>
    %90 = arith.addf %17, %89 : vector<32x128xf32>
    %91 = arith.truncf %90 : vector<32x128xf32> to vector<32x128xbf16>
    %cst_54 = arith.constant dense<0.000000e+00> : vector<32x32xf32>
    %92 = tpu.matmul %91, %91, %cst_54 {dimension_numbers = #tpu.dot_dimension_numbers<[1], [1], [0], [0], [0, 0, 1, 0], [], []>} : vector<32x128xbf16>, vector<32x128xbf16>, vector<32x32xf32> -> vector<32x32xf32>
    %93 = arith.truncf %92 : vector<32x32xf32> to vector<32x32xbf16>
    %94 = arith.truncf %10 : vector<1x32xf32> to vector<1x32xbf16>
    %cst_55 = arith.constant 1.000000e+00 : bf16
    %95 = vector.broadcast %cst_55 : bf16 to vector<1x32xbf16>
    %96 = tpu.iota {dimensions = array<i32: 0>} : vector<32x128xi32>
    %c0_56 = arith.constant 0 : index
    %c0_57 = arith.constant 0 : index
    %97 = vector.load %arg6[%c0_56, %c0_57] : memref<4x128xi32, #tpu.memory_space<vmem>>, vector<1x128xi32>
    %c1_58 = arith.constant 1 : index
    %c0_59 = arith.constant 0 : index
    %98 = vector.load %arg6[%c1_58, %c0_59] : memref<4x128xi32, #tpu.memory_space<vmem>>, vector<1x128xi32>
    %99 = vector.broadcast %97 : vector<1x128xi32> to vector<32x128xi32>
    %100 = arith.cmpi eq, %96, %99 : vector<32x128xi32>
    %101 = arith.extui %100 : vector<32x128xi1> to vector<32x128xi32>
    %102 = arith.sitofp %101 : vector<32x128xi32> to vector<32x128xf32>
    %103 = arith.truncf %102 : vector<32x128xf32> to vector<32x128xbf16>
    %104 = vector.broadcast %98 : vector<1x128xi32> to vector<32x128xi32>
    %105 = arith.cmpi eq, %96, %104 : vector<32x128xi32>
    %106 = arith.extui %105 : vector<32x128xi1> to vector<32x128xi32>
    %107 = arith.sitofp %106 : vector<32x128xi32> to vector<32x128xf32>
    %108 = arith.truncf %107 : vector<32x128xf32> to vector<32x128xbf16>
    %cst_60 = arith.constant dense<0.000000e+00> : vector<32x128xf32>
    %109 = tpu.matmul %93, %108, %cst_60 {dimension_numbers = #tpu.dot_dimension_numbers<[1], [0], [0], [1], [0, 0, 1, 1], [], []>} : vector<32x32xbf16>, vector<32x128xbf16>, vector<32x128xf32> -> vector<32x128xf32>
    %110 = arith.truncf %109 : vector<32x128xf32> to vector<32x128xbf16>
    %111 = arith.mulf %103, %110 : vector<32x128xbf16>
    %cst_61 = arith.constant dense<0.000000e+00> : vector<1x128xf32>
    %112 = tpu.matmul %95, %111, %cst_61 {dimension_numbers = #tpu.dot_dimension_numbers<[1], [0], [0], [1], [0, 0, 1, 1], [], []>} : vector<1x32xbf16>, vector<32x128xbf16>, vector<1x128xf32> -> vector<1x128xf32>
    %113 = arith.addf %103, %108 : vector<32x128xbf16>
    %cst_62 = arith.constant dense<0.000000e+00> : vector<1x128xf32>
    %114 = tpu.matmul %94, %113, %cst_62 {dimension_numbers = #tpu.dot_dimension_numbers<[1], [0], [0], [1], [0, 0, 1, 1], [], []>} : vector<1x32xbf16>, vector<32x128xbf16>, vector<1x128xf32> -> vector<1x128xf32>
    %115 = arith.addf %112, %114 : vector<1x128xf32>
    %c2_63 = arith.constant 2 : index
    %c0_64 = arith.constant 0 : index
    %116 = vector.load %arg6[%c2_63, %c0_64] : memref<4x128xi32, #tpu.memory_space<vmem>>, vector<1x128xi32>
    %c3_65 = arith.constant 3 : index
    %c0_66 = arith.constant 0 : index
    %117 = vector.load %arg6[%c3_65, %c0_66] : memref<4x128xi32, #tpu.memory_space<vmem>>, vector<1x128xi32>
    %118 = vector.broadcast %116 : vector<1x128xi32> to vector<32x128xi32>
    %119 = arith.cmpi eq, %96, %118 : vector<32x128xi32>
    %120 = arith.extui %119 : vector<32x128xi1> to vector<32x128xi32>
    %121 = arith.sitofp %120 : vector<32x128xi32> to vector<32x128xf32>
    %122 = arith.truncf %121 : vector<32x128xf32> to vector<32x128xbf16>
    %123 = vector.broadcast %117 : vector<1x128xi32> to vector<32x128xi32>
    %124 = arith.cmpi eq, %96, %123 : vector<32x128xi32>
    %125 = arith.extui %124 : vector<32x128xi1> to vector<32x128xi32>
    %126 = arith.sitofp %125 : vector<32x128xi32> to vector<32x128xf32>
    %127 = arith.truncf %126 : vector<32x128xf32> to vector<32x128xbf16>
    %cst_67 = arith.constant dense<0.000000e+00> : vector<32x128xf32>
    %128 = tpu.matmul %93, %127, %cst_67 {dimension_numbers = #tpu.dot_dimension_numbers<[1], [0], [0], [1], [0, 0, 1, 1], [], []>} : vector<32x32xbf16>, vector<32x128xbf16>, vector<32x128xf32> -> vector<32x128xf32>
    %129 = arith.truncf %128 : vector<32x128xf32> to vector<32x128xbf16>
    %130 = arith.mulf %122, %129 : vector<32x128xbf16>
    %cst_68 = arith.constant dense<0.000000e+00> : vector<1x128xf32>
    %131 = tpu.matmul %95, %130, %cst_68 {dimension_numbers = #tpu.dot_dimension_numbers<[1], [0], [0], [1], [0, 0, 1, 1], [], []>} : vector<1x32xbf16>, vector<32x128xbf16>, vector<1x128xf32> -> vector<1x128xf32>
    %132 = arith.addf %122, %127 : vector<32x128xbf16>
    %cst_69 = arith.constant dense<0.000000e+00> : vector<1x128xf32>
    %133 = tpu.matmul %94, %132, %cst_69 {dimension_numbers = #tpu.dot_dimension_numbers<[1], [0], [0], [1], [0, 0, 1, 1], [], []>} : vector<1x32xbf16>, vector<32x128xbf16>, vector<1x128xf32> -> vector<1x128xf32>
    %134 = arith.addf %131, %133 : vector<1x128xf32>
    %135 = arith.subf %134, %115 : vector<1x128xf32>
    %cst_70 = arith.constant 1.000000e+00 : f32
    %136 = vector.broadcast %cst_70 : f32 to vector<1x128xf32>
    %137 = arith.addf %135, %136 : vector<1x128xf32>
    %cst_71 = arith.constant 0.000000e+00 : f32
    %138 = vector.broadcast %cst_71 : f32 to vector<1x128xf32>
    %139 = arith.maximumf %137, %138 : vector<1x128xf32>
    %c0_i32 = arith.constant 0 : i32
    %140 = vector.broadcast %c0_i32 : i32 to vector<1x128xi32>
    %141 = arith.cmpi sge, %97, %140 : vector<1x128xi32>
    %cst_72 = arith.constant 0.000000e+00 : f32
    %142 = vector.broadcast %cst_72 : f32 to vector<1x128xf32>
    %143 = arith.select %141, %139, %142 : vector<1x128xi1>, vector<1x128xf32>
    %c0_73 = arith.constant 0 : index
    %c0_74 = arith.constant 0 : index
    %144 = vector.load %arg7[%c0_73, %c0_74] : memref<1x128xf32, #tpu.memory_space<vmem>>, vector<1x128xf32>
    tpu.vector_store %arg7[%c0_73, %c0_74], %143 {strides = array<i32>} : memref<1x128xf32, #tpu.memory_space<vmem>>, vector<1x128xf32>,
    return
  }
}

</mosaic_0001>

<llo_original>
// kernel: pinsage_forward.1
$region0: #{pinsage_forward.1}
  #allocation0 [shape = 'u32[]', space=smem, size = 0x4, offset = 0x4, fixed_abs, tag = 'smem constant byte address 0x4 - core index']
  #allocation1 [shape = 'u32[144,128]{1,0:T(1,128)}', space=vmem, size = 0x12000, scoped, tag = 'internal scratch']
  #allocation2 [shape = 'bf16[64,256]{1,0:T(16,128)(2,1)}', space=vmem, size = 0x8000, scoped, tag = 'scratch operand']
  %s0 = inlined_call_operand.vmem [shape: bf16[128,128], index: 0, kind: input, shape index: {}]
  %s1 = inlined_call_operand.vmem [shape: f32[128,128], index: 1, kind: input, shape index: {}]
  %s2 = inlined_call_operand.vmem [shape: bf16[64,128], index: 2, kind: input, shape index: {}]
  %s3 = inlined_call_operand.vmem [shape: bf16[32,64], index: 3, kind: input, shape index: {}]
  %s4 = inlined_call_operand.vmem [shape: bf16[896,128], index: 4, kind: input, shape index: {}]
  %s5 = inlined_call_operand.vmem [shape: f32[6,128], index: 5, kind: input, shape index: {}]
  %s6 = inlined_call_operand.vmem [shape: s32[4,128], index: 6, kind: input, shape index: {}]
  %s7 = inlined_call_operand.vmem [shape: f32[1,128], index: 7, kind: output, shape index: {}]
  %s8 = sld [smem:[#allocation0]]
  $region38: #{pinsage_forward.1} parent=0
    _
  %s10 = ssub.s32 1, %s8
  %s11 = scalar_select 0, %s10, %s8
  // Predicated region
  $region2: #{pinsage_forward.1} parent=0 // pred_check
    _
  $region3: #{pinsage_forward.1} parent=0 // pred_check_branch
    %13 = sbr.rel (0) target = $region5
  $region4: #{pinsage_forward.1} parent=0 // pred_region
    _
  $region5: #{pinsage_forward.1} parent=0 // pred_fallthru
    _
  // Predicated region
  $region6: #{pinsage_forward.1} parent=0 // pred_check
    _
  $region7: #{pinsage_forward.1} parent=0 // pred_check_branch
    %15 = sbr.rel (0) target = $region9
  $region8: #{pinsage_forward.1} parent=0 // pred_region
    _
  $region9: #{pinsage_forward.1} parent=0 // pred_fallthru
    _
  // Predicated region
  $region10: #{pinsage_forward.1} parent=0 // pred_check
    _
  $region11: #{pinsage_forward.1} parent=0 // pred_check_branch
    %17 = sbr.rel (0) target = $region13
  $region12: #{pinsage_forward.1} parent=0 // pred_region
    _
  $region13: #{pinsage_forward.1} parent=0 // pred_fallthru
    _
  // Predicated region
  $region14: #{pinsage_forward.1} parent=0 // pred_check
    _
  $region15: #{pinsage_forward.1} parent=0 // pred_check_branch
    %19 = sbr.rel (0) target = $region17
  $region16: #{pinsage_forward.1} parent=0 // pred_region
    _
  $region17: #{pinsage_forward.1} parent=0 // pred_fallthru
    _
  // Predicated region
  $region18: #{pinsage_forward.1} parent=0 // pred_check
    _
  $region19: #{pinsage_forward.1} parent=0 // pred_check_branch
    %21 = sbr.rel (0) target = $region21
  $region20: #{pinsage_forward.1} parent=0 // pred_region
    _
  $region21: #{pinsage_forward.1} parent=0 // pred_fallthru
    _
  // Predicated region
  $region22: #{pinsage_forward.1} parent=0 // pred_check
    _
  $region23: #{pinsage_forward.1} parent=0 // pred_check_branch
    %23 = sbr.rel (0) target = $region25
  $region24: #{pinsage_forward.1} parent=0 // pred_region
    _
  $region25: #{pinsage_forward.1} parent=0 // pred_fallthru
    _
  // Predicated region
  $region26: #{pinsage_forward.1} parent=0 // pred_check
    _
  $region27: #{pinsage_forward.1} parent=0 // pred_check_branch
    %25 = sbr.rel (0) target = $region29
  $region28: #{pinsage_forward.1} parent=0 // pred_region
    _
  $region29: #{pinsage_forward.1} parent=0 // pred_fallthru
    _
  %v28 = vld [vmem:[%s4] sm:$0xf]
  %v29 = vld [vmem:[%s4 + $0x4] sm:$0xf]
  %v30 = vld [vmem:[%s4 + $0x8] sm:$0xf]
  %v31 = vld [vmem:[%s4 + $0xc] sm:$0xf]
  %v32 = vld [vmem:[%s4 + $0x10] sm:$0xf]
  %v33 = vld [vmem:[%s4 + $0x14] sm:$0xf]
  %v34 = vld [vmem:[%s4 + $0x18] sm:$0xf]
  %v35 = vld [vmem:[%s4 + $0x1c] sm:$0xf]
  %v36 = vld [vmem:[%s4 + $0x20] sm:$0xf]
  %v37 = vld [vmem:[%s4 + $0x24] sm:$0xf]
  %v38 = vld [vmem:[%s4 + $0x28] sm:$0xf]
  %v39 = vld [vmem:[%s4 + $0x2c] sm:$0xf]
  %v40 = vld [vmem:[%s4 + $0x30] sm:$0xf]
  %v41 = vld [vmem:[%s4 + $0x34] sm:$0xf]
  %v42 = vld [vmem:[%s4 + $0x38] sm:$0xf]
  %v43 = vld [vmem:[%s4 + $0x3c] sm:$0xf]
  %v44 = vld [vmem:[%s4 + $0x40] sm:$0xf]
  %v45 = vld [vmem:[%s4 + $0x44] sm:$0xf]
  %v46 = vld [vmem:[%s4 + $0x48] sm:$0xf]
  %v47 = vld [vmem:[%s4 + $0x4c] sm:$0xf]
  %v48 = vld [vmem:[%s4 + $0x50] sm:$0xf]
  %v49 = vld [vmem:[%s4 + $0x54] sm:$0xf]
  %v50 = vld [vmem:[%s4 + $0x58] sm:$0xf]
  %v51 = vld [vmem:[%s4 + $0x5c] sm:$0xf]
  %v52 = vld [vmem:[%s4 + $0x60] sm:$0xf]
  %v53 = vld [vmem:[%s4 + $0x64] sm:$0xf]
  %v54 = vld [vmem:[%s4 + $0x68] sm:$0xf]
  %v55 = vld [vmem:[%s4 + $0x6c] sm:$0xf]
  %v56 = vld [vmem:[%s4 + $0x70] sm:$0xf]
  %v57 = vld [vmem:[%s4 + $0x74] sm:$0xf]
  %v58 = vld [vmem:[%s4 + $0x78] sm:$0xf]
  %v59 = vld [vmem:[%s4 + $0x7c] sm:$0xf]
  %v60 = vld [vmem:[%s4 + $0x80] sm:$0xf]
  %v61 = vld [vmem:[%s4 + $0x84] sm:$0xf]
  %v62 = vld [vmem:[%s4 + $0x88] sm:$0xf]
  %v63 = vld [vmem:[%s4 + $0x8c] sm:$0xf]
  %v64 = vld [vmem:[%s4 + $0x90] sm:$0xf]
  %v65 = vld [vmem:[%s4 + $0x94] sm:$0xf]
  %v66 = vld [vmem:[%s4 + $0x98] sm:$0xf]
  %v67 = vld [vmem:[%s4 + $0x9c] sm:$0xf]
  %v68 = vld [vmem:[%s4 + $0xa0] sm:$0xf]
  %v69 = vld [vmem:[%s4 + $0xa4] sm:$0xf]
  %v70 = vld [vmem:[%s4 + $0xa8] sm:$0xf]
  %v71 = vld [vmem:[%s4 + $0xac] sm:$0xf]
  %v72 = vld [vmem:[%s4 + $0xb0] sm:$0xf]
  %v73 = vld [vmem:[%s4 + $0xb4] sm:$0xf]
  %v74 = vld [vmem:[%s4 + $0xb8] sm:$0xf]
  %v75 = vld [vmem:[%s4 + $0xbc] sm:$0xf]
  %v76 = vld [vmem:[%s4 + $0xc0] sm:$0xf]
  %v77 = vld [vmem:[%s4 + $0xc4] sm:$0xf]
  %v78 = vld [vmem:[%s4 + $0xc8] sm:$0xf]
  %v79 = vld [vmem:[%s4 + $0xcc] sm:$0xf]
  %v80 = vld [vmem:[%s4 + $0xd0] sm:$0xf]
  %v81 = vld [vmem:[%s4 + $0xd4] sm:$0xf]
  %v82 = vld [vmem:[%s4 + $0xd8] sm:$0xf]
  %v83 = vld [vmem:[%s4 + $0xdc] sm:$0xf]
  %v84 = vld [vmem:[%s4 + $0xe0] sm:$0xf]
  %v85 = vld [vmem:[%s4 + $0xe4] sm:$0xf]
  %v86 = vld [vmem:[%s4 + $0xe8] sm:$0xf]
  %v87 = vld [vmem:[%s4 + $0xec] sm:$0xf]
  %v88 = vld [vmem:[%s4 + $0xf0] sm:$0xf]
  %v89 = vld [vmem:[%s4 + $0xf4] sm:$0xf]
  %v90 = vld [vmem:[%s4 + $0xf8] sm:$0xf]
  %v91 = vld [vmem:[%s4 + $0xfc] sm:$0xf]
  %v92 = vld [vmem:[%s4 + $0x100] sm:$0xf]
  %v93 = vld [vmem:[%s4 + $0x104] sm:$0xf]
  %v94 = vld [vmem:[%s4 + $0x108] sm:$0xf]
  %v95 = vld [vmem:[%s4 + $0x10c] sm:$0xf]
  %v96 = vld [vmem:[%s4 + $0x110] sm:$0xf]
  %v97 = vld [vmem:[%s4 + $0x114] sm:$0xf]
  %v98 = vld [vmem:[%s4 + $0x118] sm:$0xf]
  %v99 = vld [vmem:[%s4 + $0x11c] sm:$0xf]
  %v100 = vld [vmem:[%s4 + $0x120] sm:$0xf]
  %v101 = vld [vmem:[%s4 + $0x124] sm:$0xf]
  %v102 = vld [vmem:[%s4 + $0x128] sm:$0xf]
  %v103 = vld [vmem:[%s4 + $0x12c] sm:$0xf]
  %v104 = vld [vmem:[%s4 + $0x130] sm:$0xf]
  %v105 = vld [vmem:[%s4 + $0x134] sm:$0xf]
  %v106 = vld [vmem:[%s4 + $0x138] sm:$0xf]
  %v107 = vld [vmem:[%s4 + $0x13c] sm:$0xf]
  %v108 = vld [vmem:[%s4 + $0x140] sm:$0xf]
  %v109 = vld [vmem:[%s4 + $0x144] sm:$0xf]
  %v110 = vld [vmem:[%s4 + $0x148] sm:$0xf]
  %v111 = vld [vmem:[%s4 + $0x14c] sm:$0xf]
  %v112 = vld [vmem:[%s4 + $0x150] sm:$0xf]
  %v113 = vld [vmem:[%s4 + $0x154] sm:$0xf]
  %v114 = vld [vmem:[%s4 + $0x158] sm:$0xf]
  %v115 = vld [vmem:[%s4 + $0x15c] sm:$0xf]
  %v116 = vld [vmem:[%s4 + $0x160] sm:$0xf]
  %v117 = vld [vmem:[%s4 + $0x164] sm:$0xf]
  %v118 = vld [vmem:[%s4 + $0x168] sm:$0xf]
  %v119 = vld [vmem:[%s4 + $0x16c] sm:$0xf]
  %v120 = vld [vmem:[%s4 + $0x170] sm:$0xf]
  %v121 = vld [vmem:[%s4 + $0x174] sm:$0xf]
  %v122 = vld [vmem:[%s4 + $0x178] sm:$0xf]
  %v123 = vld [vmem:[%s4 + $0x17c] sm:$0xf]
  %v124 = vld [vmem:[%s4 + $0x180] sm:$0xf]
  %v125 = vld [vmem:[%s4 + $0x184] sm:$0xf]
  %v126 = vld [vmem:[%s4 + $0x188] sm:$0xf]
  %v127 = vld [vmem:[%s4 + $0x18c] sm:$0xf]
  %v128 = vld [vmem:[%s4 + $0x190] sm:$0xf]
  %v129 = vld [vmem:[%s4 + $0x194] sm:$0xf]
  %v130 = vld [vmem:[%s4 + $0x198] sm:$0xf]
  %v131 = vld [vmem:[%s4 + $0x19c] sm:$0xf]
  %v132 = vld [vmem:[%s4 + $0x1a0] sm:$0xf]
  %v133 = vld [vmem:[%s4 + $0x1a4] sm:$0xf]
  %v134 = vld [vmem:[%s4 + $0x1a8] sm:$0xf]
  %v135 = vld [vmem:[%s4 + $0x1ac] sm:$0xf]
  %v136 = vld [vmem:[%s4 + $0x1b0] sm:$0xf]
  %v137 = vld [vmem:[%s4 + $0x1b4] sm:$0xf]
  %v138 = vld [vmem:[%s4 + $0x1b8] sm:$0xf]
  %v139 = vld [vmem:[%s4 + $0x1bc] sm:$0xf]
  %v140 = vld [vmem:[%s5] sm:$0x1]
  %v141 = vld [vmem:[%s5 + $0x1] sm:$0x1]
  %v142 = vld [vmem:[%s5 + $0x2] sm:$0x1]
  %v143 = vld [vmem:[%s5 + $0x3] sm:$0x1]
  %v144 = vld [vmem:[%s5 + $0x4] sm:$0x1]
  %v145 = vld [vmem:[%s5 + $0x5] sm:$0x1]
  %v146 = vld [vmem:[%s0] sm:$0xf]
  %v147 = vld [vmem:[%s0 + $0x4] sm:$0xf]
  %v148 = vld [vmem:[%s0 + $0x8] sm:$0xf]
  %v149 = vld [vmem:[%s0 + $0xc] sm:$0xf]
  %v150 = vld [vmem:[%s0 + $0x10] sm:$0xf]
  %v151 = vld [vmem:[%s0 + $0x14] sm:$0xf]
  %v152 = vld [vmem:[%s0 + $0x18] sm:$0xf]
  %v153 = vld [vmem:[%s0 + $0x1c] sm:$0xf]
  %v154 = vld [vmem:[%s0 + $0x20] sm:$0xf]
  %v155 = vld [vmem:[%s0 + $0x24] sm:$0xf]
  %v156 = vld [vmem:[%s0 + $0x28] sm:$0xf]
  %v157 = vld [vmem:[%s0 + $0x2c] sm:$0xf]
  %v158 = vld [vmem:[%s0 + $0x30] sm:$0xf]
  %v159 = vld [vmem:[%s0 + $0x34] sm:$0xf]
  %v160 = vld [vmem:[%s0 + $0x38] sm:$0xf]
  %v161 = vld [vmem:[%s0 + $0x3c] sm:$0xf]
  %v162 = vlaneseq
  %v163 = vshrl.u32 %v162, 7
  %v164 = vsub.s32 0, %v163
  %v165 = vrot.slane %v140, %v164
  %v182 = vunpack.c.l.b16 %v146
  %v183 = vunpack.c.l.b16 %v147
  %v184 = vunpack.c.l.b16 %v148
  %v185 = vunpack.c.l.b16 %v149
  %v186 = vunpack.c.l.b16 %v150
  %v187 = vunpack.c.l.b16 %v151
  %v188 = vunpack.c.l.b16 %v152
  %v189 = vunpack.c.l.b16 %v153
  %v190 = vunpack.c.l.b16 %v154
  %v191 = vunpack.c.l.b16 %v155
  %v192 = vunpack.c.l.b16 %v156
  %v193 = vunpack.c.l.b16 %v157
  %v194 = vunpack.c.l.b16 %v158
  %v195 = vunpack.c.l.b16 %v159
  %v196 = vunpack.c.l.b16 %v160
  %v197 = vunpack.c.l.b16 %v161
  %v198 = vpack.c.b16 %v183, %v182
  %v199 = vpack.c.b16 %v185, %v184
  %v200 = vpack.c.b16 %v187, %v186
  %v201 = vpack.c.b16 %v189, %v188
  %v202 = vpack.c.b16 %v191, %v190
  %v203 = vpack.c.b16 %v193, %v192
  %v204 = vpack.c.b16 %v195, %v194
  %v205 = vpack.c.b16 %v197, %v196
  %v230 = vunpack.c.l.b16 %v28
  %v231 = vunpack.c.l.b16 %v29
  %v232 = vunpack.c.l.b16 %v30
  %v233 = vunpack.c.l.b16 %v31
  %v234 = vunpack.c.l.b16 %v32
  %v235 = vunpack.c.l.b16 %v33
  %v236 = vunpack.c.l.b16 %v34
  %v237 = vunpack.c.l.b16 %v35
  %v238 = vunpack.c.l.b16 %v36
  %v239 = vunpack.c.l.b16 %v37
  %v240 = vunpack.c.l.b16 %v38
  %v241 = vunpack.c.l.b16 %v39
  %v242 = vunpack.c.l.b16 %v40
  %v243 = vunpack.c.l.b16 %v41
  %v244 = vunpack.c.l.b16 %v42
  %v245 = vunpack.c.l.b16 %v43
  %v246 = vpack.c.b16 %v231, %v230
  %v247 = vpack.c.b16 %v233, %v232
  %v248 = vpack.c.b16 %v235, %v234
  %v249 = vpack.c.b16 %v237, %v236
  %v250 = vpack.c.b16 %v239, %v238
  %v251 = vpack.c.b16 %v241, %v240
  %v252 = vpack.c.b16 %v243, %v242
  %v253 = vpack.c.b16 %v245, %v244
  %262 = vmatprep.subr.bf16.mxu0 0
  %263 = vmatpush1.bf16.msra.mxu0 %v246
  %264 = vmatprep.subr.bf16.mxu0 0
  %265 = vmatpush1.bf16.msra.mxu0 %v247
  %266 = vmatprep.subr.bf16.mxu0 0
  %267 = vmatpush1.bf16.msra.mxu0 %v248
  %268 = vmatprep.subr.bf16.mxu0 0
  %269 = vmatpush1.bf16.msra.mxu0 %v249
  %270 = vmatprep.subr.bf16.mxu0 0
  %271 = vmatpush1.bf16.msra.mxu0 %v250
  %272 = vmatprep.subr.bf16.mxu0 0
  %273 = vmatpush1.bf16.msra.mxu0 %v251
  %274 = vmatprep.subr.bf16.mxu0 0
  %275 = vmatpush1.bf16.msra.mxu0 %v252
  %276 = vmatprep.subr.bf16.mxu0 0
  %277 = vmatpush1.bf16.msra.mxu0 %v253
  %278 = vmatprep.subr.bf16.mxu0 0
  %279 = vmatpush1.bf16.msra.mxu0 0
  %280 = vmatprep.subr.bf16.mxu0 0
  %281 = vmatpush1.bf16.msra.mxu0 0
  %282 = vmatprep.subr.bf16.mxu0 0
  %283 = vmatpush1.bf16.msra.mxu0 0
  %284 = vmatprep.subr.bf16.mxu0 0
  %285 = vmatpush1.bf16.msra.mxu0 0
  %286 = vmatprep.subr.bf16.mxu0 0
  %287 = vmatpush1.bf16.msra.mxu0 0
  %288 = vmatprep.subr.bf16.mxu0 0
  %289 = vmatpush1.bf16.msra.mxu0 0
  %290 = vmatprep.subr.bf16.mxu0 0
  %291 = vmatpush1.bf16.msra.mxu0 0
  %292 = vmatprep.subr.bf16.mxu0 0
  %293 = vmatpush1.bf16.msra.mxu0 0
  %294 = vmatprep.mubr.bf16.mxu0 0
  %295 = vmatmul.mubr.bf16.gmra.mrb[0].mxu0 %v198
  %v296 = vpop.f32.mrb[0].mxu0
  %v297 = vadd.f32 %v165, %v296
  %v298 = vpop.f32.mrb[0].mxu0
  %v299 = vpop.f32.mrb[0].mxu0
  %v300 = vadd.f32 %v165, %v299
  %v301 = vpop.f32.mrb[0].mxu0
  %302 = vmatprep.mubr.bf16.mxu0 0
  %303 = vmatmul.mubr.bf16.gmra.mrb[0].mxu0 %v199
  %v304 = vpop.f32.mrb[0].mxu0
  %v305 = vadd.f32 %v165, %v304
  %v306 = vpop.f32.mrb[0].mxu0
  %v307 = vpop.f32.mrb[0].mxu0
  %v308 = vadd.f32 %v165, %v307
  %v309 = vpop.f32.mrb[0].mxu0
  %310 = vmatprep.mubr.bf16.mxu0 0
  %311 = vmatmul.mubr.bf16.gmra.mrb[0].mxu0 %v200
  %v312 = vpop.f32.mrb[0].mxu0
  %v313 = vadd.f32 %v165, %v312
  %v314 = vpop.f32.mrb[0].mxu0
  %v315 = vpop.f32.mrb[0].mxu0
  %v316 = vadd.f32 %v165, %v315
  %v317 = vpop.f32.mrb[0].mxu0
  %318 = vmatprep.mubr.bf16.mxu0 0
  %319 = vmatmul.mubr.bf16.gmra.mrb[0].mxu0 %v201
  %v320 = vpop.f32.mrb[0].mxu0
  %v321 = vadd.f32 %v165, %v320
  %v322 = vpop.f32.mrb[0].mxu0
  %v323 = vpop.f32.mrb[0].mxu0
  %v324 = vadd.f32 %v165, %v323
  %v325 = vpop.f32.mrb[0].mxu0
  %326 = vmatprep.mubr.bf16.mxu0 0
  %327 = vmatmul.mubr.bf16.gmra.mrb[0].mxu0 %v202
  %v328 = vpop.f32.mrb[0].mxu0
  %v329 = vadd.f32 %v165, %v328
  %v330 = vpop.f32.mrb[0].mxu0
  %v331 = vpop.f32.mrb[0].mxu0
  %v332 = vadd.f32 %v165, %v331
  %v333 = vpop.f32.mrb[0].mxu0
  %334 = vmatprep.mubr.bf16.mxu0 0
  %335 = vmatmul.mubr.bf16.gmra.mrb[0].mxu0 %v203
  %v336 = vpop.f32.mrb[0].mxu0
  %v337 = vadd.f32 %v165, %v336
  %v338 = vpop.f32.mrb[0].mxu0
  %v339 = vpop.f32.mrb[0].mxu0
  %v340 = vadd.f32 %v165, %v339
  %v341 = vpop.f32.mrb[0].mxu0
  %342 = vmatprep.mubr.bf16.mxu0 0
  %343 = vmatmul.mubr.bf16.gmra.mrb[0].mxu0 %v204
  %v344 = vpop.f32.mrb[0].mxu0
  %v345 = vadd.f32 %v165, %v344
  %v346 = vpop.f32.mrb[0].mxu0
  %v347 = vpop.f32.mrb[0].mxu0
  %v348 = vadd.f32 %v165, %v347
  %v349 = vpop.f32.mrb[0].mxu0
  %350 = vmatprep.mubr.bf16.mxu0 0
  %351 = vmatmul.mubr.bf16.gmra.mrb[0].mxu0 %v205
  %v352 = vpop.f32.mrb[0].mxu0
  %v353 = vadd.f32 %v165, %v352
  %v354 = vpop.f32.mrb[0].mxu0
  %v355 = vpop.f32.mrb[0].mxu0
  %v356 = vadd.f32 %v165, %v355
  %v357 = vpop.f32.mrb[0].mxu0
  %358 = vdwg.mxu0
  %v359 = vld [vmem:[%s1] sm:$0xff]
  %v360 = vld [vmem:[%s1 + $0x8] sm:$0xff]
  %v361 = vld [vmem:[%s1 + $0x10] sm:$0xff]
  %v362 = vld [vmem:[%s1 + $0x18] sm:$0xff]
  %v363 = vld [vmem:[%s1 + $0x20] sm:$0xff]
  %v364 = vld [vmem:[%s1 + $0x28] sm:$0xff]
  %v365 = vld [vmem:[%s1 + $0x30] sm:$0xff]
  %v366 = vld [vmem:[%s1 + $0x38] sm:$0xff]
  %v367 = vld [vmem:[%s1 + $0x40] sm:$0xff]
  %v368 = vld [vmem:[%s1 + $0x48] sm:$0xff]
  %v369 = vld [vmem:[%s1 + $0x50] sm:$0xff]
  %v370 = vld [vmem:[%s1 + $0x58] sm:$0xff]
  %v371 = vld [vmem:[%s1 + $0x60] sm:$0xff]
  %v372 = vld [vmem:[%s1 + $0x68] sm:$0xff]
  %v373 = vld [vmem:[%s1 + $0x70] sm:$0xff]
  %v374 = vld [vmem:[%s1 + $0x78] sm:$0xff]
  %v375 = vadd.f32 %v297, %v359
  %v376 = vadd.f32 %v300, %v360
  %v377 = vadd.f32 %v305, %v361
  %v378 = vadd.f32 %v308, %v362
  %v379 = vadd.f32 %v313, %v363
  %v380 = vadd.f32 %v316, %v364
  %v381 = vadd.f32 %v321, %v365
  %v382 = vadd.f32 %v324, %v366
  %v383 = vadd.f32 %v329, %v367
  %v384 = vadd.f32 %v332, %v368
  %v385 = vadd.f32 %v337, %v369
  %v386 = vadd.f32 %v340, %v370
  %v387 = vadd.f32 %v345, %v371
  %v388 = vadd.f32 %v348, %v372
  %v389 = vadd.f32 %v353, %v373
  %v390 = vadd.f32 %v356, %v374
  %v391 = vpack.c.bf16 %v376, %v375
  %v392 = vpack.c.bf16 %v378, %v377
  %v393 = vpack.c.bf16 %v380, %v379
  %v394 = vpack.c.bf16 %v382, %v381
  %v395 = vpack.c.bf16 %v384, %v383
  %v396 = vpack.c.bf16 %v386, %v385
  %v397 = vpack.c.bf16 %v388, %v387
  %v398 = vpack.c.bf16 %v390, %v389
  %v399 = vld [vmem:[%s2] sm:$0xf]
  %v400 = vld [vmem:[%s2 + $0x4] sm:$0xf]
  %v401 = vld [vmem:[%s2 + $0x8] sm:$0xf]
  %v402 = vld [vmem:[%s2 + $0xc] sm:$0xf]
  %v403 = vld [vmem:[%s2 + $0x10] sm:$0xf]
  %v404 = vld [vmem:[%s2 + $0x14] sm:$0xf]
  %v405 = vld [vmem:[%s2 + $0x18] sm:$0xf]
  %v406 = vld [vmem:[%s2 + $0x1c] sm:$0xf]
  %v407 = vlaneseq
  %v408 = vshrl.u32 %v407, 7
  %v409 = vsub.s32 0, %v408
  %v410 = vrot.slane %v141, %v409
  %v427 = vunpack.c.l.b16 %v44
  %v428 = vunpack.c.l.b16 %v45
  %v429 = vunpack.c.l.b16 %v46
  %v430 = vunpack.c.l.b16 %v47
  %v431 = vunpack.c.l.b16 %v48
  %v432 = vunpack.c.l.b16 %v49
  %v433 = vunpack.c.l.b16 %v50
  %v434 = vunpack.c.l.b16 %v51
  %v435 = vunpack.c.l.b16 %v52
  %v436 = vunpack.c.l.b16 %v53
  %v437 = vunpack.c.l.b16 %v54
  %v438 = vunpack.c.l.b16 %v55
  %v439 = vunpack.c.l.b16 %v56
  %v440 = vunpack.c.l.b16 %v57
  %v441 = vunpack.c.l.b16 %v58
  %v442 = vunpack.c.l.b16 %v59
  %v443 = vpack.c.b16 %v428, %v427
  %v444 = vpack.c.b16 %v430, %v429
  %v445 = vpack.c.b16 %v432, %v431
  %v446 = vpack.c.b16 %v434, %v433
  %v447 = vpack.c.b16 %v436, %v435
  %v448 = vpack.c.b16 %v438, %v437
  %v449 = vpack.c.b16 %v440, %v439
  %v450 = vpack.c.b16 %v442, %v441
  %459 = vmatprep.subr.bf16.mxu0 0
  %460 = vmatpush1.bf16.msra.mxu0 %v443
  %461 = vmatprep.subr.bf16.mxu0 0
  %462 = vmatpush1.bf16.msra.mxu0 %v444
  %463 = vmatprep.subr.bf16.mxu0 0
  %464 = vmatpush1.bf16.msra.mxu0 %v445
  %465 = vmatprep.subr.bf16.mxu0 0
  %466 = vmatpush1.bf16.msra.mxu0 %v446
  %467 = vmatprep.subr.bf16.mxu0 0
  %468 = vmatpush1.bf16.msra.mxu0 %v447
  %469 = vmatprep.subr.bf16.mxu0 0
  %470 = vmatpush1.bf16.msra.mxu0 %v448
  %471 = vmatprep.subr.bf16.mxu0 0
  %472 = vmatpush1.bf16.msra.mxu0 %v449
  %473 = vmatprep.subr.bf16.mxu0 0
  %474 = vmatpush1.bf16.msra.mxu0 %v450
  %475 = vmatprep.subr.bf16.mxu0 0
  %476 = vmatpush1.bf16.msra.mxu0 0
  %477 = vmatprep.subr.bf16.mxu0 0
  %478 = vmatpush1.bf16.msra.mxu0 0
  %479 = vmatprep.subr.bf16.mxu0 0
  %480 = vmatpush1.bf16.msra.mxu0 0
  %481 = vmatprep.subr.bf16.mxu0 0
  %482 = vmatpush1.bf16.msra.mxu0 0
  %483 = vmatprep.subr.bf16.mxu0 0
  %484 = vmatpush1.bf16.msra.mxu0 0
  %485 = vmatprep.subr.bf16.mxu0 0
  %486 = vmatpush1.bf16.msra.mxu0 0
  %487 = vmatprep.subr.bf16.mxu0 0
  %488 = vmatpush1.bf16.msra.mxu0 0
  %489 = vmatprep.subr.bf16.mxu0 0
  %490 = vmatpush1.bf16.msra.mxu0 0
  %491 = vmatprep.mubr.bf16.mxu0 0
  %492 = vmatmul.mubr.bf16.gmra.mrb[0].mxu0 %v391
  %v493 = vpop.f32.mrb[0].mxu0
  %v494 = vadd.f32 %v410, %v493
  %v495 = vpop.f32.mrb[0].mxu0
  %v496 = vpop.f32.mrb[0].mxu0
  %v497 = vadd.f32 %v410, %v496
  %v498 = vpop.f32.mrb[0].mxu0
  %499 = vmatprep.mubr.bf16.mxu0 0
  %500 = vmatmul.mubr.bf16.gmra.mrb[0].mxu0 %v392
  %v501 = vpop.f32.mrb[0].mxu0
  %v502 = vadd.f32 %v410, %v501
  %v503 = vpop.f32.mrb[0].mxu0
  %v504 = vpop.f32.mrb[0].mxu0
  %v505 = vadd.f32 %v410, %v504
  %v506 = vpop.f32.mrb[0].mxu0
  %507 = vmatprep.mubr.bf16.mxu0 0
  %508 = vmatmul.mubr.bf16.gmra.mrb[0].mxu0 %v393
  %v509 = vpop.f32.mrb[0].mxu0
  %v510 = vadd.f32 %v410, %v509
  %v511 = vpop.f32.mrb[0].mxu0
  %v512 = vpop.f32.mrb[0].mxu0
  %v513 = vadd.f32 %v410, %v512
  %v514 = vpop.f32.mrb[0].mxu0
  %515 = vmatprep.mubr.bf16.mxu0 0
  %516 = vmatmul.mubr.bf16.gmra.mrb[0].mxu0 %v394
  %v517 = vpop.f32.mrb[0].mxu0
  %v518 = vadd.f32 %v410, %v517
  %v519 = vpop.f32.mrb[0].mxu0
  %v520 = vpop.f32.mrb[0].mxu0
  %v521 = vadd.f32 %v410, %v520
  %v522 = vpop.f32.mrb[0].mxu0
  %523 = vmatprep.mubr.bf16.mxu0 0
  %524 = vmatmul.mubr.bf16.gmra.mrb[0].mxu0 %v395
  %v525 = vpop.f32.mrb[0].mxu0
  %v526 = vadd.f32 %v410, %v525
  %v527 = vpop.f32.mrb[0].mxu0
  %v528 = vpop.f32.mrb[0].mxu0
  %v529 = vadd.f32 %v410, %v528
  %v530 = vpop.f32.mrb[0].mxu0
  %531 = vmatprep.mubr.bf16.mxu0 0
  %532 = vmatmul.mubr.bf16.gmra.mrb[0].mxu0 %v396
  %v533 = vpop.f32.mrb[0].mxu0
  %v534 = vadd.f32 %v410, %v533
  %v535 = vpop.f32.mrb[0].mxu0
  %v536 = vpop.f32.mrb[0].mxu0
  %v537 = vadd.f32 %v410, %v536
  %v538 = vpop.f32.mrb[0].mxu0
  %539 = vmatprep.mubr.bf16.mxu0 0
  %540 = vmatmul.mubr.bf16.gmra.mrb[0].mxu0 %v397
  %v541 = vpop.f32.mrb[0].mxu0
  %v542 = vadd.f32 %v410, %v541
  %v543 = vpop.f32.mrb[0].mxu0
  %v544 = vpop.f32.mrb[0].mxu0
  %v545 = vadd.f32 %v410, %v544
  %v546 = vpop.f32.mrb[0].mxu0
  %547 = vmatprep.mubr.bf16.mxu0 0
  %548 = vmatmul.mubr.bf16.gmra.mrb[0].mxu0 %v398
  %v549 = vpop.f32.mrb[0].mxu0
  %v550 = vadd.f32 %v410, %v549
  %v551 = vpop.f32.mrb[0].mxu0
  %v552 = vpop.f32.mrb[0].mxu0
  %v553 = vadd.f32 %v410, %v552
  %v554 = vpop.f32.mrb[0].mxu0
  %555 = vdwg.mxu0
  %v556 = vmax.f32 %v494, 0.0
  %v557 = vmax.f32 %v497, 0.0
  %v558 = vmax.f32 %v502, 0.0
  %v559 = vmax.f32 %v505, 0.0
  %v560 = vmax.f32 %v510, 0.0
  %v561 = vmax.f32 %v513, 0.0
  %v562 = vmax.f32 %v518, 0.0
  %v563 = vmax.f32 %v521, 0.0
  %v564 = vmax.f32 %v526, 0.0
  %v565 = vmax.f32 %v529, 0.0
  %v566 = vmax.f32 %v534, 0.0
  %v567 = vmax.f32 %v537, 0.0
  %v568 = vmax.f32 %v542, 0.0
  %v569 = vmax.f32 %v545, 0.0
  %v570 = vmax.f32 %v550, 0.0
  %v571 = vmax.f32 %v553, 0.0
  %v572 = vpack.c.bf16 %v557, %v556
  %v573 = vpack.c.bf16 %v559, %v558
  %v574 = vpack.c.bf16 %v561, %v560
  %v575 = vpack.c.bf16 %v563, %v562
  %v576 = vpack.c.bf16 %v565, %v564
  %v577 = vpack.c.bf16 %v567, %v566
  %v578 = vpack.c.bf16 %v569, %v568
  %v579 = vpack.c.bf16 %v571, %v570
  %v588 = vunpack.c.l.b16 %v399
  %v589 = vunpack.c.l.b16 %v400
  %v590 = vunpack.c.l.b16 %v401
  %v591 = vunpack.c.l.b16 %v402
  %v592 = vunpack.c.l.b16 %v403
  %v593 = vunpack.c.l.b16 %v404
  %v594 = vunpack.c.l.b16 %v405
  %v595 = vunpack.c.l.b16 %v406
  %v596 = vpack.c.b16 %v589, %v588
  %v597 = vpack.c.b16 %v591, %v590
  %v598 = vpack.c.b16 %v593, %v592
  %v599 = vpack.c.b16 %v595, %v594
  %604 = vmatprep.subr.bf16.mxu0 0
  %605 = vmatpush1.bf16.msra.mxu0 %v572
  %606 = vmatprep.subr.bf16.mxu0 0
  %607 = vmatpush1.bf16.msra.mxu0 %v573
  %608 = vmatprep.subr.bf16.mxu0 0
  %609 = vmatpush1.bf16.msra.mxu0 %v574
  %610 = vmatprep.subr.bf16.mxu0 0
  %611 = vmatpush1.bf16.msra.mxu0 %v575
  %612 = vmatprep.subr.bf16.mxu0 0
  %613 = vmatpush1.bf16.msra.mxu0 %v576
  %614 = vmatprep.subr.bf16.mxu0 0
  %615 = vmatpush1.bf16.msra.mxu0 %v577
  %616 = vmatprep.subr.bf16.mxu0 0
  %617 = vmatpush1.bf16.msra.mxu0 %v578
  %618 = vmatprep.subr.bf16.mxu0 0
  %619 = vmatpush1.bf16.msra.mxu0 %v579
  %620 = vmatprep.subr.bf16.mxu0 0
  %621 = vmatpush1.bf16.msra.mxu0 0
  %622 = vmatprep.subr.bf16.mxu0 0
  %623 = vmatpush1.bf16.msra.mxu0 0
  %624 = vmatprep.subr.bf16.mxu0 0
  %625 = vmatpush1.bf16.msra.mxu0 0
  %626 = vmatprep.subr.bf16.mxu0 0
  %627 = vmatpush1.bf16.msra.mxu0 0
  %628 = vmatprep.subr.bf16.mxu0 0
  %629 = vmatpush1.bf16.msra.mxu0 0
  %630 = vmatprep.subr.bf16.mxu0 0
  %631 = vmatpush1.bf16.msra.mxu0 0
  %632 = vmatprep.subr.bf16.mxu0 0
  %633 = vmatpush1.bf16.msra.mxu0 0
  %634 = vmatprep.subr.bf16.mxu0 0
  %635 = vmatpush1.bf16.msra.mxu0 0
  %636 = vmatprep.mubr.bf16.mxu0 0
  %637 = vmatmul.mubr.bf16.gmra.mrb[0].mxu0 %v596
  %v638 = vpop.f32.mrb[0].mxu0
  %v639 = vadd.f32 0.0, %v638
  %v640 = vpop.f32.mrb[0].mxu0
  %v641 = vpop.f32.mrb[0].mxu0
  %v642 = vadd.f32 0.0, %v641
  %v643 = vpop.f32.mrb[0].mxu0
  %644 = vmatprep.mubr.bf16.mxu0 0
  %645 = vmatmul.mubr.bf16.gmra.mrb[0].mxu0 %v597
  %v646 = vpop.f32.mrb[0].mxu0
  %v647 = vadd.f32 0.0, %v646
  %v648 = vpop.f32.mrb[0].mxu0
  %v649 = vpop.f32.mrb[0].mxu0
  %v650 = vadd.f32 0.0, %v649
  %v651 = vpop.f32.mrb[0].mxu0
  %652 = vmatprep.mubr.bf16.mxu0 0
  %653 = vmatmul.mubr.bf16.gmra.mrb[0].mxu0 %v598
  %v654 = vpop.f32.mrb[0].mxu0
  %v655 = vadd.f32 0.0, %v654
  %v656 = vpop.f32.mrb[0].mxu0
  %v657 = vpop.f32.mrb[0].mxu0
  %v658 = vadd.f32 0.0, %v657
  %v659 = vpop.f32.mrb[0].mxu0
  %660 = vmatprep.mubr.bf16.mxu0 0
  %661 = vmatmul.mubr.bf16.gmra.mrb[0].mxu0 %v599
  %v662 = vpop.f32.mrb[0].mxu0
  %v663 = vadd.f32 0.0, %v662
  %v664 = vpop.f32.mrb[0].mxu0
  %v665 = vpop.f32.mrb[0].mxu0
  %v666 = vadd.f32 0.0, %v665
  %v667 = vpop.f32.mrb[0].mxu0
  %668 = vdwg.mxu0
  %669 = vmatprep.subr.bf16.mxu0 0
  %670 = vmatpush1.bf16.msra.mxu0 1065369472
  %671 = vmatprep.subr.bf16.mxu0 0
  %672 = vmatpush1.bf16.msra.mxu0 1065369472
  %673 = vmatprep.subr.bf16.mxu0 0
  %674 = vmatpush1.bf16.msra.mxu0 1065369472
  %675 = vmatprep.subr.bf16.mxu0 0
  %676 = vmatpush1.bf16.msra.mxu0 1065369472
  %677 = vmatprep.subr.bf16.mxu0 0
  %678 = vmatpush1.bf16.msra.mxu0 1065369472
  %679 = vmatprep.subr.bf16.mxu0 0
  %680 = vmatpush1.bf16.msra.mxu0 1065369472
  %681 = vmatprep.subr.bf16.mxu0 0
  %682 = vmatpush1.bf16.msra.mxu0 1065369472
  %683 = vmatprep.subr.bf16.mxu0 0
  %684 = vmatpush1.bf16.msra.mxu0 1065369472
  %685 = vmatprep.subr.bf16.mxu0 0
  %686 = vmatpush1.bf16.msra.mxu0 0
  %687 = vmatprep.subr.bf16.mxu0 0
  %688 = vmatpush1.bf16.msra.mxu0 0
  %689 = vmatprep.subr.bf16.mxu0 0
  %690 = vmatpush1.bf16.msra.mxu0 0
  %691 = vmatprep.subr.bf16.mxu0 0
  %692 = vmatpush1.bf16.msra.mxu0 0
  %693 = vmatprep.subr.bf16.mxu0 0
  %694 = vmatpush1.bf16.msra.mxu0 0
  %695 = vmatprep.subr.bf16.mxu0 0
  %696 = vmatpush1.bf16.msra.mxu0 0
  %697 = vmatprep.subr.bf16.mxu0 0
  %698 = vmatpush1.bf16.msra.mxu0 0
  %699 = vmatprep.subr.bf16.mxu0 0
  %700 = vmatpush1.bf16.msra.mxu0 0
  %701 = vmatprep.mubr.bf16.mxu0 0
  %702 = vmatmul.mubr.bf16.gmra.mrb[0].mxu0 %v596
  %v703 = vpop.f32.mrb[0].mxu0
  %v704 = vadd.f32 0.0, %v703
  %v705 = vpop.f32.mrb[0].mxu0
  %v706 = vpop.f32.mrb[0].mxu0
  %v707 = vadd.f32 0.0, %v706
  %v708 = vpop.f32.mrb[0].mxu0
  %709 = vmatprep.mubr.bf16.mxu0 0
  %710 = vmatmul.mubr.bf16.gmra.mrb[0].mxu0 %v597
  %v711 = vpop.f32.mrb[0].mxu0
  %v712 = vadd.f32 0.0, %v711
  %v713 = vpop.f32.mrb[0].mxu0
  %v714 = vpop.f32.mrb[0].mxu0
  %v715 = vadd.f32 0.0, %v714
  %v716 = vpop.f32.mrb[0].mxu0
  %717 = vmatprep.mubr.bf16.mxu0 0
  %718 = vmatmul.mubr.bf16.gmra.mrb[0].mxu0 %v598
  %v719 = vpop.f32.mrb[0].mxu0
  %v720 = vadd.f32 0.0, %v719
  %v721 = vpop.f32.mrb[0].mxu0
  %v722 = vpop.f32.mrb[0].mxu0
  %v723 = vadd.f32 0.0, %v722
  %v724 = vpop.f32.mrb[0].mxu0
  %725 = vmatprep.mubr.bf16.mxu0 0
  %726 = vmatmul.mubr.bf16.gmra.mrb[0].mxu0 %v599
  %v727 = vpop.f32.mrb[0].mxu0
  %v728 = vadd.f32 0.0, %v727
  %v729 = vpop.f32.mrb[0].mxu0
  %v730 = vpop.f32.mrb[0].mxu0
  %v731 = vadd.f32 0.0, %v730
  %v732 = vpop.f32.mrb[0].mxu0
  %733 = vdwg.mxu0
  %v734 = vmax.f32 %v704, 1.0
  %v735 = vmax.f32 %v707, 1.0
  %v736 = vmax.f32 %v712, 1.0
  %v737 = vmax.f32 %v715, 1.0
  %v738 = vmax.f32 %v720, 1.0
  %v739 = vmax.f32 %v723, 1.0
  %v740 = vmax.f32 %v728, 1.0
  %v741 = vmax.f32 %v731, 1.0
  %v742 = vrcp.pop %v734
  %v743 = vrcp.pop %v735
  %v744 = vrcp.pop %v736
  %v745 = vrcp.pop %v737
  %v746 = vrcp.pop %v738
  %v747 = vrcp.pop %v739
  %v748 = vrcp.pop %v740
  %v749 = vrcp.pop %v741
  %751 = vset.pattern.permute.xlu0 0
  %752 = vperm.xlu0 %751, %v742
  %v753 = vpop.permute.xlu0 %752
  %756 = vset.pattern.permute.xlu0 0
  %757 = vperm.xlu0 %756, %v743
  %v758 = vpop.permute.xlu0 %757
  %761 = vset.pattern.permute.xlu0 0
  %762 = vperm.xlu0 %761, %v744
  %v763 = vpop.permute.xlu0 %762
  %766 = vset.pattern.permute.xlu0 0
  %767 = vperm.xlu0 %766, %v745
  %v768 = vpop.permute.xlu0 %767
  %771 = vset.pattern.permute.xlu0 0
  %772 = vperm.xlu0 %771, %v746
  %v773 = vpop.permute.xlu0 %772
  %776 = vset.pattern.permute.xlu0 0
  %777 = vperm.xlu0 %776, %v747
  %v778 = vpop.permute.xlu0 %777
  %781 = vset.pattern.permute.xlu0 0
  %782 = vperm.xlu0 %781, %v748
  %v783 = vpop.permute.xlu0 %782
  %786 = vset.pattern.permute.xlu0 0
  %787 = vperm.xlu0 %786, %v749
  %v788 = vpop.permute.xlu0 %787
  %v790 = vmul.f32 %v639, %v753
  %v791 = vmul.f32 %v642, %v758
  %v792 = vmul.f32 %v647, %v763
  %v793 = vmul.f32 %v650, %v768
  %v794 = vmul.f32 %v655, %v773
  %v795 = vmul.f32 %v658, %v778
  %v796 = vmul.f32 %v663, %v783
  %v797 = vmul.f32 %v666, %v788
  %v798 = vpack.c.bf16 %v791, %v790
  %v799 = vpack.c.bf16 %v793, %v792
  %v800 = vpack.c.bf16 %v795, %v794
  %v801 = vpack.c.bf16 %v797, %v796
  %802 = vst [vmem:[#allocation2] sm:$0xff] %v798
  %803 = vst [vmem:[#allocation2 + $0x10] sm:$0xff] %v799
  %804 = vst [vmem:[#allocation2 + $0x20] sm:$0xff] %v800
  %805 = vst [vmem:[#allocation2 + $0x30] sm:$0xff] %v801
  %806 = vst [vmem:[#allocation2 + $0x8] sm:$0xff] %v391
  %807 = vst [vmem:[#allocation2 + $0x18] sm:$0xff] %v392
  %808 = vst [vmem:[#allocation2 + $0x28] sm:$0xff] %v393
  %809 = vst [vmem:[#allocation2 + $0x38] sm:$0xff] %v394
  %v810 = vld [vmem:[#allocation2] sm:$0xff]
  %v811 = vld [vmem:[#allocation2 + $0x8] sm:$0xff]
  %v812 = vld [vmem:[#allocation2 + $0x10] sm:$0xff]
  %v813 = vld [vmem:[#allocation2 + $0x18] sm:$0xff]
  %v814 = vld [vmem:[#allocation2 + $0x20] sm:$0xff]
  %v815 = vld [vmem:[#allocation2 + $0x28] sm:$0xff]
  %v816 = vld [vmem:[#allocation2 + $0x30] sm:$0xff]
  %v817 = vld [vmem:[#allocation2 + $0x38] sm:$0xff]
  %v818 = vlaneseq
  %v819 = vshrl.u32 %v818, 7
  %v820 = vsub.s32 0, %v819
  %v821 = vrot.slane %v142, %v820
  %v854 = vunpack.c.l.b16 %v60
  %v855 = vunpack.c.l.b16 %v61
  %v856 = vunpack.c.l.b16 %v62
  %v857 = vunpack.c.l.b16 %v63
  %v858 = vunpack.c.l.b16 %v64
  %v859 = vunpack.c.l.b16 %v65
  %v860 = vunpack.c.l.b16 %v66
  %v861 = vunpack.c.l.b16 %v67
  %v862 = vunpack.c.l.b16 %v68
  %v863 = vunpack.c.l.b16 %v69
  %v864 = vunpack.c.l.b16 %v70
  %v865 = vunpack.c.l.b16 %v71
  %v866 = vunpack.c.l.b16 %v72
  %v867 = vunpack.c.l.b16 %v73
  %v868 = vunpack.c.l.b16 %v74
  %v869 = vunpack.c.l.b16 %v75
  %v870 = vunpack.c.l.b16 %v76
  %v871 = vunpack.c.l.b16 %v77
  %v872 = vunpack.c.l.b16 %v78
  %v873 = vunpack.c.l.b16 %v79
  %v874 = vunpack.c.l.b16 %v80
  %v875 = vunpack.c.l.b16 %v81
  %v876 = vunpack.c.l.b16 %v82
  %v877 = vunpack.c.l.b16 %v83
  %v878 = vunpack.c.l.b16 %v84
  %v879 = vunpack.c.l.b16 %v85
  %v880 = vunpack.c.l.b16 %v86
  %v881 = vunpack.c.l.b16 %v87
  %v882 = vunpack.c.l.b16 %v88
  %v883 = vunpack.c.l.b16 %v89
  %v884 = vunpack.c.l.b16 %v90
  %v885 = vunpack.c.l.b16 %v91
  %v886 = vpack.c.b16 %v855, %v854
  %v887 = vpack.c.b16 %v857, %v856
  %v888 = vpack.c.b16 %v859, %v858
  %v889 = vpack.c.b16 %v861, %v860
  %v890 = vpack.c.b16 %v863, %v862
  %v891 = vpack.c.b16 %v865, %v864
  %v892 = vpack.c.b16 %v867, %v866
  %v893 = vpack.c.b16 %v869, %v868
  %v894 = vpack.c.b16 %v871, %v870
  %v895 = vpack.c.b16 %v873, %v872
  %v896 = vpack.c.b16 %v875, %v874
  %v897 = vpack.c.b16 %v877, %v876
  %v898 = vpack.c.b16 %v879, %v878
  %v899 = vpack.c.b16 %v881, %v880
  %v900 = vpack.c.b16 %v883, %v882
  %v901 = vpack.c.b16 %v885, %v884
  %918 = vmatprep.subr.bf16.mxu0 0
  %919 = vmatpush1.bf16.msra.mxu0 %v886
  %920 = vmatprep.subr.bf16.mxu0 0
  %921 = vmatpush1.bf16.msra.mxu0 %v887
  %922 = vmatprep.subr.bf16.mxu0 0
  %923 = vmatpush1.bf16.msra.mxu0 %v888
  %924 = vmatprep.subr.bf16.mxu0 0
  %925 = vmatpush1.bf16.msra.mxu0 %v889
  %926 = vmatprep.subr.bf16.mxu0 0
  %927 = vmatpush1.bf16.msra.mxu0 %v890
  %928 = vmatprep.subr.bf16.mxu0 0
  %929 = vmatpush1.bf16.msra.mxu0 %v891
  %930 = vmatprep.subr.bf16.mxu0 0
  %931 = vmatpush1.bf16.msra.mxu0 %v892
  %932 = vmatprep.subr.bf16.mxu0 0
  %933 = vmatpush1.bf16.msra.mxu0 %v893
  %934 = vmatprep.subr.bf16.mxu0 0
  %935 = vmatpush1.bf16.msra.mxu0 %v894
  %936 = vmatprep.subr.bf16.mxu0 0
  %937 = vmatpush1.bf16.msra.mxu0 %v895
  %938 = vmatprep.subr.bf16.mxu0 0
  %939 = vmatpush1.bf16.msra.mxu0 %v896
  %940 = vmatprep.subr.bf16.mxu0 0
  %941 = vmatpush1.bf16.msra.mxu0 %v897
  %942 = vmatprep.subr.bf16.mxu0 0
  %943 = vmatpush1.bf16.msra.mxu0 %v898
  %944 = vmatprep.subr.bf16.mxu0 0
  %945 = vmatpush1.bf16.msra.mxu0 %v899
  %946 = vmatprep.subr.bf16.mxu0 0
  %947 = vmatpush1.bf16.msra.mxu0 %v900
  %948 = vmatprep.subr.bf16.mxu0 0
  %949 = vmatpush1.bf16.msra.mxu0 %v901
  %950 = vmatprep.mubr.bf16.mxu0 %v811
  %951 = vmatmul.mubr.bf16.gmra.mrb[0].mxu0 %v810
  %v952 = vpop.f32.mrb[0].mxu0
  %v953 = vadd.f32 %v821, %v952
  %v954 = vpop.f32.mrb[0].mxu0
  %v955 = vpop.f32.mrb[0].mxu0
  %v956 = vadd.f32 %v821, %v955
  %v957 = vpop.f32.mrb[0].mxu0
  %958 = vmatprep.mubr.bf16.mxu0 %v813
  %959 = vmatmul.mubr.bf16.gmra.mrb[0].mxu0 %v812
  %v960 = vpop.f32.mrb[0].mxu0
  %v961 = vadd.f32 %v821, %v960
  %v962 = vpop.f32.mrb[0].mxu0
  %v963 = vpop.f32.mrb[0].mxu0
  %v964 = vadd.f32 %v821, %v963
  %v965 = vpop.f32.mrb[0].mxu0
  %966 = vmatprep.mubr.bf16.mxu0 %v815
  %967 = vmatmul.mubr.bf16.gmra.mrb[0].mxu0 %v814
  %v968 = vpop.f32.mrb[0].mxu0
  %v969 = vadd.f32 %v821, %v968
  %v970 = vpop.f32.mrb[0].mxu0
  %v971 = vpop.f32.mrb[0].mxu0
  %v972 = vadd.f32 %v821, %v971
  %v973 = vpop.f32.mrb[0].mxu0
  %974 = vmatprep.mubr.bf16.mxu0 %v817
  %975 = vmatmul.mubr.bf16.gmra.mrb[0].mxu0 %v816
  %v976 = vpop.f32.mrb[0].mxu0
  %v977 = vadd.f32 %v821, %v976
  %v978 = vpop.f32.mrb[0].mxu0
  %v979 = vpop.f32.mrb[0].mxu0
  %v980 = vadd.f32 %v821, %v979
  %v981 = vpop.f32.mrb[0].mxu0
  %982 = vdwg.mxu0
  %v983 = vmax.f32 %v953, 0.0
  %v984 = vmax.f32 %v956, 0.0
  %v985 = vmax.f32 %v961, 0.0
  %v986 = vmax.f32 %v964, 0.0
  %v987 = vmax.f32 %v969, 0.0
  %v988 = vmax.f32 %v972, 0.0
  %v989 = vmax.f32 %v977, 0.0
  %v990 = vmax.f32 %v980, 0.0
  %v991 = vmul.f32 %v983, %v983
  %v992 = vmul.f32 %v984, %v984
  %v993 = vmul.f32 %v985, %v985
  %v994 = vmul.f32 %v986, %v986
  %v995 = vmul.f32 %v987, %v987
  %v996 = vmul.f32 %v988, %v988
  %v997 = vmul.f32 %v989, %v989
  %v998 = vmul.f32 %v990, %v990
  %999 = vadd.xlane.f32.xlu0 %v991
  %v1000 = vpop.xlane.xlu0 %999
  %1001 = vadd.xlane.f32.xlu0 %v992
  %v1002 = vpop.xlane.xlu0 %1001
  %1003 = vadd.xlane.f32.xlu0 %v993
  %v1004 = vpop.xlane.xlu0 %1003
  %1005 = vadd.xlane.f32.xlu0 %v994
  %v1006 = vpop.xlane.xlu0 %1005
  %1007 = vadd.xlane.f32.xlu0 %v995
  %v1008 = vpop.xlane.xlu0 %1007
  %1009 = vadd.xlane.f32.xlu0 %v996
  %v1010 = vpop.xlane.xlu0 %1009
  %1011 = vadd.xlane.f32.xlu0 %v997
  %v1012 = vpop.xlane.xlu0 %1011
  %1013 = vadd.xlane.f32.xlu0 %v998
  %v1014 = vpop.xlane.xlu0 %1013
  %vm1015 = vcmp.eq.f32.partialorder %v1000, 0.0
  %vm1016 = vcmp.eq.f32.partialorder %v1002, 0.0
  %vm1017 = vcmp.eq.f32.partialorder %v1004, 0.0
  %vm1018 = vcmp.eq.f32.partialorder %v1006, 0.0
  %vm1019 = vcmp.eq.f32.partialorder %v1008, 0.0
  %vm1020 = vcmp.eq.f32.partialorder %v1010, 0.0
  %vm1021 = vcmp.eq.f32.partialorder %v1012, 0.0
  %vm1022 = vcmp.eq.f32.partialorder %v1014, 0.0
  %v1023 = vrsqrt.pop %v1000
  %v1024 = vrsqrt.pop %v1002
  %v1025 = vrsqrt.pop %v1004
  %v1026 = vrsqrt.pop %v1006
  %v1027 = vrsqrt.pop %v1008
  %v1028 = vrsqrt.pop %v1010
  %v1029 = vrsqrt.pop %v1012
  %v1030 = vrsqrt.pop %v1014
  %v1031 = vsel %vm1015, 1.0, %v1023
  %v1032 = vsel %vm1016, 1.0, %v1024
  %v1033 = vsel %vm1017, 1.0, %v1025
  %v1034 = vsel %vm1018, 1.0, %v1026
  %v1035 = vsel %vm1019, 1.0, %v1027
  %v1036 = vsel %vm1020, 1.0, %v1028
  %v1037 = vsel %vm1021, 1.0, %v1029
  %v1038 = vsel %vm1022, 1.0, %v1030
  %v1039 = vmul.f32 %v983, %v1031
  %v1040 = vmul.f32 %v984, %v1032
  %v1041 = vmul.f32 %v985, %v1033
  %v1042 = vmul.f32 %v986, %v1034
  %v1043 = vmul.f32 %v987, %v1035
  %v1044 = vmul.f32 %v988, %v1036
  %v1045 = vmul.f32 %v989, %v1037
  %v1046 = vmul.f32 %v990, %v1038
  %v1047 = vpack.c.bf16 %v1040, %v1039
  %v1048 = vpack.c.bf16 %v1042, %v1041
  %v1049 = vpack.c.bf16 %v1044, %v1043
  %v1050 = vpack.c.bf16 %v1046, %v1045
  %v1051 = vld [vmem:[%s3] sm:$0xf]
  %v1052 = vld [vmem:[%s3 + $0x4] sm:$0xf]
  %v1053 = vld [vmem:[%s3 + $0x8] sm:$0xf]
  %v1054 = vld [vmem:[%s3 + $0xc] sm:$0xf]
  %v1055 = vlaneseq
  %v1056 = vshrl.u32 %v1055, 7
  %v1057 = vsub.s32 0, %v1056
  %v1058 = vrot.slane %v143, %v1057
  %v1075 = vunpack.c.l.b16 %v92
  %v1076 = vunpack.c.l.b16 %v93
  %v1077 = vunpack.c.l.b16 %v94
  %v1078 = vunpack.c.l.b16 %v95
  %v1079 = vunpack.c.l.b16 %v96
  %v1080 = vunpack.c.l.b16 %v97
  %v1081 = vunpack.c.l.b16 %v98
  %v1082 = vunpack.c.l.b16 %v99
  %v1083 = vunpack.c.l.b16 %v100
  %v1084 = vunpack.c.l.b16 %v101
  %v1085 = vunpack.c.l.b16 %v102
  %v1086 = vunpack.c.l.b16 %v103
  %v1087 = vunpack.c.l.b16 %v104
  %v1088 = vunpack.c.l.b16 %v105
  %v1089 = vunpack.c.l.b16 %v106
  %v1090 = vunpack.c.l.b16 %v107
  %v1091 = vpack.c.b16 %v1076, %v1075
  %v1092 = vpack.c.b16 %v1078, %v1077
  %v1093 = vpack.c.b16 %v1080, %v1079
  %v1094 = vpack.c.b16 %v1082, %v1081
  %v1095 = vpack.c.b16 %v1084, %v1083
  %v1096 = vpack.c.b16 %v1086, %v1085
  %v1097 = vpack.c.b16 %v1088, %v1087
  %v1098 = vpack.c.b16 %v1090, %v1089
  %1107 = vmatprep.subr.bf16.mxu0 0
  %1108 = vmatpush1.bf16.msra.mxu0 %v1091
  %1109 = vmatprep.subr.bf16.mxu0 0
  %1110 = vmatpush1.bf16.msra.mxu0 %v1092
  %1111 = vmatprep.subr.bf16.mxu0 0
  %1112 = vmatpush1.bf16.msra.mxu0 %v1093
  %1113 = vmatprep.subr.bf16.mxu0 0
  %1114 = vmatpush1.bf16.msra.mxu0 %v1094
  %1115 = vmatprep.subr.bf16.mxu0 0
  %1116 = vmatpush1.bf16.msra.mxu0 %v1095
  %1117 = vmatprep.subr.bf16.mxu0 0
  %1118 = vmatpush1.bf16.msra.mxu0 %v1096
  %1119 = vmatprep.subr.bf16.mxu0 0
  %1120 = vmatpush1.bf16.msra.mxu0 %v1097
  %1121 = vmatprep.subr.bf16.mxu0 0
  %1122 = vmatpush1.bf16.msra.mxu0 %v1098
  %1123 = vmatprep.subr.bf16.mxu0 0
  %1124 = vmatpush1.bf16.msra.mxu0 0
  %1125 = vmatprep.subr.bf16.mxu0 0
  %1126 = vmatpush1.bf16.msra.mxu0 0
  %1127 = vmatprep.subr.bf16.mxu0 0
  %1128 = vmatpush1.bf16.msra.mxu0 0
  %1129 = vmatprep.subr.bf16.mxu0 0
  %1130 = vmatpush1.bf16.msra.mxu0 0
  %1131 = vmatprep.subr.bf16.mxu0 0
  %1132 = vmatpush1.bf16.msra.mxu0 0
  %1133 = vmatprep.subr.bf16.mxu0 0
  %1134 = vmatpush1.bf16.msra.mxu0 0
  %1135 = vmatprep.subr.bf16.mxu0 0
  %1136 = vmatpush1.bf16.msra.mxu0 0
  %1137 = vmatprep.subr.bf16.mxu0 0
  %1138 = vmatpush1.bf16.msra.mxu0 0
  %1139 = vmatprep.mubr.bf16.mxu0 0
  %1140 = vmatmul.mubr.bf16.gmra.mrb[0].mxu0 %v1047
  %v1141 = vpop.f32.mrb[0].mxu0
  %v1142 = vadd.f32 %v1058, %v1141
  %v1143 = vpop.f32.mrb[0].mxu0
  %v1144 = vpop.f32.mrb[0].mxu0
  %v1145 = vadd.f32 %v1058, %v1144
  %v1146 = vpop.f32.mrb[0].mxu0
  %1147 = vmatprep.mubr.bf16.mxu0 0
  %1148 = vmatmul.mubr.bf16.gmra.mrb[0].mxu0 %v1048
  %v1149 = vpop.f32.mrb[0].mxu0
  %v1150 = vadd.f32 %v1058, %v1149
  %v1151 = vpop.f32.mrb[0].mxu0
  %v1152 = vpop.f32.mrb[0].mxu0
  %v1153 = vadd.f32 %v1058, %v1152
  %v1154 = vpop.f32.mrb[0].mxu0
  %1155 = vmatprep.mubr.bf16.mxu0 0
  %1156 = vmatmul.mubr.bf16.gmra.mrb[0].mxu0 %v1049
  %v1157 = vpop.f32.mrb[0].mxu0
  %v1158 = vadd.f32 %v1058, %v1157
  %v1159 = vpop.f32.mrb[0].mxu0
  %v1160 = vpop.f32.mrb[0].mxu0
  %v1161 = vadd.f32 %v1058, %v1160
  %v1162 = vpop.f32.mrb[0].mxu0
  %1163 = vmatprep.mubr.bf16.mxu0 0
  %1164 = vmatmul.mubr.bf16.gmra.mrb[0].mxu0 %v1050
  %v1165 = vpop.f32.mrb[0].mxu0
  %v1166 = vadd.f32 %v1058, %v1165
  %v1167 = vpop.f32.mrb[0].mxu0
  %v1168 = vpop.f32.mrb[0].mxu0
  %v1169 = vadd.f32 %v1058, %v1168
  %v1170 = vpop.f32.mrb[0].mxu0
  %1171 = vdwg.mxu0
  %v1172 = vmax.f32 %v1142, 0.0
  %v1173 = vmax.f32 %v1145, 0.0
  %v1174 = vmax.f32 %v1150, 0.0
  %v1175 = vmax.f32 %v1153, 0.0
  %v1176 = vmax.f32 %v1158, 0.0
  %v1177 = vmax.f32 %v1161, 0.0
  %v1178 = vmax.f32 %v1166, 0.0
  %v1179 = vmax.f32 %v1169, 0.0
  %v1180 = vpack.c.bf16 %v1173, %v1172
  %v1181 = vpack.c.bf16 %v1175, %v1174
  %v1182 = vpack.c.bf16 %v1177, %v1176
  %v1183 = vpack.c.bf16 %v1179, %v1178
  %v1188 = vunpack.c.l.b16 %v1051
  %v1189 = vunpack.c.l.b16 %v1052
  %v1190 = vunpack.c.l.b16 %v1053
  %v1191 = vunpack.c.l.b16 %v1054
  %v1192 = vpack.c.b16 %v1189, %v1188
  %v1193 = vpack.c.b16 %v1191, %v1190
  %vm1194 = vcmask 523264
  %v1196 = vsel %vm1194, %v1192, 0
  %v1199 = vsel %vm1194, %v1193, 0
  %1201 = vmatprep.subr.bf16.mxu0 0
  %1202 = vmatpush1.bf16.msra.mxu0 %v1180
  %1203 = vmatprep.subr.bf16.mxu0 0
  %1204 = vmatpush1.bf16.msra.mxu0 %v1181
  %1205 = vmatprep.subr.bf16.mxu0 0
  %1206 = vmatpush1.bf16.msra.mxu0 %v1182
  %1207 = vmatprep.subr.bf16.mxu0 0
  %1208 = vmatpush1.bf16.msra.mxu0 %v1183
  %1209 = vmatprep.subr.bf16.mxu0 0
  %1210 = vmatpush1.bf16.msra.mxu0 0
  %1211 = vmatprep.subr.bf16.mxu0 0
  %1212 = vmatpush1.bf16.msra.mxu0 0
  %1213 = vmatprep.subr.bf16.mxu0 0
  %1214 = vmatpush1.bf16.msra.mxu0 0
  %1215 = vmatprep.subr.bf16.mxu0 0
  %1216 = vmatpush1.bf16.msra.mxu0 0
  %1217 = vmatprep.subr.bf16.mxu0 0
  %1218 = vmatpush1.bf16.msra.mxu0 0
  %1219 = vmatprep.subr.bf16.mxu0 0
  %1220 = vmatpush1.bf16.msra.mxu0 0
  %1221 = vmatprep.subr.bf16.mxu0 0
  %1222 = vmatpush1.bf16.msra.mxu0 0
  %1223 = vmatprep.subr.bf16.mxu0 0
  %1224 = vmatpush1.bf16.msra.mxu0 0
  %1225 = vmatprep.subr.bf16.mxu0 0
  %1226 = vmatpush1.bf16.msra.mxu0 0
  %1227 = vmatprep.subr.bf16.mxu0 0
  %1228 = vmatpush1.bf16.msra.mxu0 0
  %1229 = vmatprep.subr.bf16.mxu0 0
  %1230 = vmatpush1.bf16.msra.mxu0 0
  %1231 = vmatprep.subr.bf16.mxu0 0
  %1232 = vmatpush1.bf16.msra.mxu0 0
  %1233 = vmatprep.mubr.bf16.mxu0 0
  %1234 = vmatmul.mubr.bf16.gmra.mrb[0].mxu0 %v1196
  %v1235 = vpop.f32.mrb[0].mxu0
  %v1236 = vadd.f32 0.0, %v1235
  %v1237 = vpop.f32.mrb[0].mxu0
  %v1238 = vpop.f32.mrb[0].mxu0
  %v1239 = vadd.f32 0.0, %v1238
  %v1240 = vpop.f32.mrb[0].mxu0
  %1241 = vmatprep.mubr.bf16.mxu0 0
  %1242 = vmatmul.mubr.bf16.gmra.mrb[0].mxu0 %v1199
  %v1243 = vpop.f32.mrb[0].mxu0
  %v1244 = vadd.f32 0.0, %v1243
  %v1245 = vpop.f32.mrb[0].mxu0
  %v1246 = vpop.f32.mrb[0].mxu0
  %v1247 = vadd.f32 0.0, %v1246
  %v1248 = vpop.f32.mrb[0].mxu0
  %1249 = vdwg.mxu0
  %1250 = vmatprep.subr.bf16.mxu0 0
  %1251 = vmatpush1.bf16.msra.mxu0 1065369472
  %1252 = vmatprep.subr.bf16.mxu0 0
  %1253 = vmatpush1.bf16.msra.mxu0 1065369472
  %1254 = vmatprep.subr.bf16.mxu0 0
  %1255 = vmatpush1.bf16.msra.mxu0 1065369472
  %1256 = vmatprep.subr.bf16.mxu0 0
  %1257 = vmatpush1.bf16.msra.mxu0 1065369472
  %1258 = vmatprep.subr.bf16.mxu0 0
  %1259 = vmatpush1.bf16.msra.mxu0 0
  %1260 = vmatprep.subr.bf16.mxu0 0
  %1261 = vmatpush1.bf16.msra.mxu0 0
  %1262 = vmatprep.subr.bf16.mxu0 0
  %1263 = vmatpush1.bf16.msra.mxu0 0
  %1264 = vmatprep.subr.bf16.mxu0 0
  %1265 = vmatpush1.bf16.msra.mxu0 0
  %1266 = vmatprep.subr.bf16.mxu0 0
  %1267 = vmatpush1.bf16.msra.mxu0 0
  %1268 = vmatprep.subr.bf16.mxu0 0
  %1269 = vmatpush1.bf16.msra.mxu0 0
  %1270 = vmatprep.subr.bf16.mxu0 0
  %1271 = vmatpush1.bf16.msra.mxu0 0
  %1272 = vmatprep.subr.bf16.mxu0 0
  %1273 = vmatpush1.bf16.msra.mxu0 0
  %1274 = vmatprep.subr.bf16.mxu0 0
  %1275 = vmatpush1.bf16.msra.mxu0 0
  %1276 = vmatprep.subr.bf16.mxu0 0
  %1277 = vmatpush1.bf16.msra.mxu0 0
  %1278 = vmatprep.subr.bf16.mxu0 0
  %1279 = vmatpush1.bf16.msra.mxu0 0
  %1280 = vmatprep.subr.bf16.mxu0 0
  %1281 = vmatpush1.bf16.msra.mxu0 0
  %1282 = vmatprep.mubr.bf16.mxu0 0
  %1283 = vmatmul.mubr.bf16.gmra.mrb[0].mxu0 %v1196
  %v1284 = vpop.f32.mrb[0].mxu0
  %v1285 = vadd.f32 0.0, %v1284
  %v1286 = vpop.f32.mrb[0].mxu0
  %v1287 = vpop.f32.mrb[0].mxu0
  %v1288 = vadd.f32 0.0, %v1287
  %v1289 = vpop.f32.mrb[0].mxu0
  %1290 = vmatprep.mubr.bf16.mxu0 0
  %1291 = vmatmul.mubr.bf16.gmra.mrb[0].mxu0 %v1199
  %v1292 = vpop.f32.mrb[0].mxu0
  %v1293 = vadd.f32 0.0, %v1292
  %v1294 = vpop.f32.mrb[0].mxu0
  %v1295 = vpop.f32.mrb[0].mxu0
  %v1296 = vadd.f32 0.0, %v1295
  %v1297 = vpop.f32.mrb[0].mxu0
  %1298 = vdwg.mxu0
  %v1299 = vmax.f32 %v1285, 1.0
  %v1300 = vmax.f32 %v1288, 1.0
  %v1301 = vmax.f32 %v1293, 1.0
  %v1302 = vmax.f32 %v1296, 1.0
  %v1303 = vrcp.pop %v1299
  %v1304 = vrcp.pop %v1300
  %v1305 = vrcp.pop %v1301
  %v1306 = vrcp.pop %v1302
  %1308 = vset.pattern.permute.xlu0 0
  %1309 = vperm.xlu0 %1308, %v1303
  %v1310 = vpop.permute.xlu0 %1309
  %1313 = vset.pattern.permute.xlu0 0
  %1314 = vperm.xlu0 %1313, %v1304
  %v1315 = vpop.permute.xlu0 %1314
  %1318 = vset.pattern.permute.xlu0 0
  %1319 = vperm.xlu0 %1318, %v1305
  %v1320 = vpop.permute.xlu0 %1319
  %1323 = vset.pattern.permute.xlu0 0
  %1324 = vperm.xlu0 %1323, %v1306
  %v1325 = vpop.permute.xlu0 %1324
  %v1327 = vmul.f32 %v1236, %v1310
  %v1328 = vmul.f32 %v1239, %v1315
  %v1329 = vmul.f32 %v1244, %v1320
  %v1330 = vmul.f32 %v1247, %v1325
  %v1331 = vpack.c.bf16 %v1328, %v1327
  %v1332 = vpack.c.bf16 %v1330, %v1329
  %1333 = vst [vmem:[#allocation2] sm:$0xff] %v1331
  %1334 = vst [vmem:[#allocation2 + $0x10] sm:$0xff] %v1332
  %1335 = vst [vmem:[#allocation2 + $0x8] sm:$0xff] %v1047
  %1336 = vst [vmem:[#allocation2 + $0x18] sm:$0xff] %v1048
  %v1337 = vld [vmem:[#allocation2] sm:$0xff]
  %v1338 = vld [vmem:[#allocation2 + $0x8] sm:$0xff]
  %v1339 = vld [vmem:[#allocation2 + $0x10] sm:$0xff]
  %v1340 = vld [vmem:[#allocation2 + $0x18] sm:$0xff]
  %v1341 = vlaneseq
  %v1342 = vshrl.u32 %v1341, 7
  %v1343 = vsub.s32 0, %v1342
  %v1344 = vrot.slane %v144, %v1343
  %v1377 = vunpack.c.l.b16 %v108
  %v1378 = vunpack.c.l.b16 %v109
  %v1379 = vunpack.c.l.b16 %v110
  %v1380 = vunpack.c.l.b16 %v111
  %v1381 = vunpack.c.l.b16 %v112
  %v1382 = vunpack.c.l.b16 %v113
  %v1383 = vunpack.c.l.b16 %v114
  %v1384 = vunpack.c.l.b16 %v115
  %v1385 = vunpack.c.l.b16 %v116
  %v1386 = vunpack.c.l.b16 %v117
  %v1387 = vunpack.c.l.b16 %v118
  %v1388 = vunpack.c.l.b16 %v119
  %v1389 = vunpack.c.l.b16 %v120
  %v1390 = vunpack.c.l.b16 %v121
  %v1391 = vunpack.c.l.b16 %v122
  %v1392 = vunpack.c.l.b16 %v123
  %v1393 = vunpack.c.l.b16 %v124
  %v1394 = vunpack.c.l.b16 %v125
  %v1395 = vunpack.c.l.b16 %v126
  %v1396 = vunpack.c.l.b16 %v127
  %v1397 = vunpack.c.l.b16 %v128
  %v1398 = vunpack.c.l.b16 %v129
  %v1399 = vunpack.c.l.b16 %v130
  %v1400 = vunpack.c.l.b16 %v131
  %v1401 = vunpack.c.l.b16 %v132
  %v1402 = vunpack.c.l.b16 %v133
  %v1403 = vunpack.c.l.b16 %v134
  %v1404 = vunpack.c.l.b16 %v135
  %v1405 = vunpack.c.l.b16 %v136
  %v1406 = vunpack.c.l.b16 %v137
  %v1407 = vunpack.c.l.b16 %v138
  %v1408 = vunpack.c.l.b16 %v139
  %v1409 = vpack.c.b16 %v1378, %v1377
  %v1410 = vpack.c.b16 %v1380, %v1379
  %v1411 = vpack.c.b16 %v1382, %v1381
  %v1412 = vpack.c.b16 %v1384, %v1383
  %v1413 = vpack.c.b16 %v1386, %v1385
  %v1414 = vpack.c.b16 %v1388, %v1387
  %v1415 = vpack.c.b16 %v1390, %v1389
  %v1416 = vpack.c.b16 %v1392, %v1391
  %v1417 = vpack.c.b16 %v1394, %v1393
  %v1418 = vpack.c.b16 %v1396, %v1395
  %v1419 = vpack.c.b16 %v1398, %v1397
  %v1420 = vpack.c.b16 %v1400, %v1399
  %v1421 = vpack.c.b16 %v1402, %v1401
  %v1422 = vpack.c.b16 %v1404, %v1403
  %v1423 = vpack.c.b16 %v1406, %v1405
  %v1424 = vpack.c.b16 %v1408, %v1407
  %1441 = vmatprep.subr.bf16.mxu0 0
  %1442 = vmatpush1.bf16.msra.mxu0 %v1409
  %1443 = vmatprep.subr.bf16.mxu0 0
  %1444 = vmatpush1.bf16.msra.mxu0 %v1410
  %1445 = vmatprep.subr.bf16.mxu0 0
  %1446 = vmatpush1.bf16.msra.mxu0 %v1411
  %1447 = vmatprep.subr.bf16.mxu0 0
  %1448 = vmatpush1.bf16.msra.mxu0 %v1412
  %1449 = vmatprep.subr.bf16.mxu0 0
  %1450 = vmatpush1.bf16.msra.mxu0 %v1413
  %1451 = vmatprep.subr.bf16.mxu0 0
  %1452 = vmatpush1.bf16.msra.mxu0 %v1414
  %1453 = vmatprep.subr.bf16.mxu0 0
  %1454 = vmatpush1.bf16.msra.mxu0 %v1415
  %1455 = vmatprep.subr.bf16.mxu0 0
  %1456 = vmatpush1.bf16.msra.mxu0 %v1416
  %1457 = vmatprep.subr.bf16.mxu0 0
  %1458 = vmatpush1.bf16.msra.mxu0 %v1417
  %1459 = vmatprep.subr.bf16.mxu0 0
  %1460 = vmatpush1.bf16.msra.mxu0 %v1418
  %1461 = vmatprep.subr.bf16.mxu0 0
  %1462 = vmatpush1.bf16.msra.mxu0 %v1419
  %1463 = vmatprep.subr.bf16.mxu0 0
  %1464 = vmatpush1.bf16.msra.mxu0 %v1420
  %1465 = vmatprep.subr.bf16.mxu0 0
  %1466 = vmatpush1.bf16.msra.mxu0 %v1421
  %1467 = vmatprep.subr.bf16.mxu0 0
  %1468 = vmatpush1.bf16.msra.mxu0 %v1422
  %1469 = vmatprep.subr.bf16.mxu0 0
  %1470 = vmatpush1.bf16.msra.mxu0 %v1423
  %1471 = vmatprep.subr.bf16.mxu0 0
  %1472 = vmatpush1.bf16.msra.mxu0 %v1424
  %1473 = vmatprep.mubr.bf16.mxu0 %v1338
  %1474 = vmatmul.mubr.bf16.gmra.mrb[0].mxu0 %v1337
  %v1475 = vpop.f32.mrb[0].mxu0
  %v1476 = vadd.f32 %v1344, %v1475
  %v1477 = vpop.f32.mrb[0].mxu0
  %v1478 = vpop.f32.mrb[0].mxu0
  %v1479 = vadd.f32 %v1344, %v1478
  %v1480 = vpop.f32.mrb[0].mxu0
  %1481 = vmatprep.mubr.bf16.mxu0 %v1340
  %1482 = vmatmul.mubr.bf16.gmra.mrb[0].mxu0 %v1339
  %v1483 = vpop.f32.mrb[0].mxu0
  %v1484 = vadd.f32 %v1344, %v1483
  %v1485 = vpop.f32.mrb[0].mxu0
  %v1486 = vpop.f32.mrb[0].mxu0
  %v1487 = vadd.f32 %v1344, %v1486
  %v1488 = vpop.f32.mrb[0].mxu0
  %1489 = vdwg.mxu0
  %v1490 = vmax.f32 %v1476, 0.0
  %v1491 = vmax.f32 %v1479, 0.0
  %v1492 = vmax.f32 %v1484, 0.0
  %v1493 = vmax.f32 %v1487, 0.0
  %v1494 = vmul.f32 %v1490, %v1490
  %v1495 = vmul.f32 %v1491, %v1491
  %v1496 = vmul.f32 %v1492, %v1492
  %v1497 = vmul.f32 %v1493, %v1493
  %1498 = vadd.xlane.f32.xlu0 %v1494
  %v1499 = vpop.xlane.xlu0 %1498
  %1500 = vadd.xlane.f32.xlu0 %v1495
  %v1501 = vpop.xlane.xlu0 %1500
  %1502 = vadd.xlane.f32.xlu0 %v1496
  %v1503 = vpop.xlane.xlu0 %1502
  %1504 = vadd.xlane.f32.xlu0 %v1497
  %v1505 = vpop.xlane.xlu0 %1504
  %vm1506 = vcmp.eq.f32.partialorder %v1499, 0.0
  %vm1507 = vcmp.eq.f32.partialorder %v1501, 0.0
  %vm1508 = vcmp.eq.f32.partialorder %v1503, 0.0
  %vm1509 = vcmp.eq.f32.partialorder %v1505, 0.0
  %v1510 = vrsqrt.pop %v1499
  %v1511 = vrsqrt.pop %v1501
  %v1512 = vrsqrt.pop %v1503
  %v1513 = vrsqrt.pop %v1505
  %v1514 = vsel %vm1506, 1.0, %v1510
  %v1515 = vsel %vm1507, 1.0, %v1511
  %v1516 = vsel %vm1508, 1.0, %v1512
  %v1517 = vsel %vm1509, 1.0, %v1513
  %v1518 = vmul.f32 %v1490, %v1514
  %v1519 = vmul.f32 %v1491, %v1515
  %v1520 = vmul.f32 %v1492, %v1516
  %v1521 = vmul.f32 %v1493, %v1517
  %v1522 = vadd.f32 %v375, %v1518
  %v1523 = vadd.f32 %v376, %v1519
  %v1524 = vadd.f32 %v377, %v1520
  %v1525 = vadd.f32 %v378, %v1521
  %v1526 = vpack.c.bf16 %v1523, %v1522
  %v1527 = vpack.c.bf16 %v1525, %v1524
  %1528 = vmatprep.subr.bf16.mxu0 0
  %1529 = vmatpush1.bf16.xpose.msra.mxu0 %v1526
  %1530 = vmatprep.subr.bf16.mxu0 0
  %1531 = vmatpush1.bf16.xpose.msra.mxu0 %v1527
  %1532 = vmatprep.subr.bf16.mxu0 0
  %1533 = vmatpush1.bf16.xpose.msra.mxu0 0
  %1534 = vmatprep.subr.bf16.mxu0 0
  %1535 = vmatpush1.bf16.xpose.msra.mxu0 0
  %1536 = vmatprep.subr.bf16.mxu0 0
  %1537 = vmatpush1.bf16.xpose.msra.mxu0 0
  %1538 = vmatprep.subr.bf16.mxu0 0
  %1539 = vmatpush1.bf16.xpose.msra.mxu0 0
  %1540 = vmatprep.subr.bf16.mxu0 0
  %1541 = vmatpush1.bf16.xpose.msra.mxu0 0
  %1542 = vmatprep.subr.bf16.mxu0 0
  %1543 = vmatpush1.bf16.xpose.msra.mxu0 0
  %1544 = vmatprep.subr.bf16.mxu0 0
  %1545 = vmatpush1.bf16.xpose.msra.mxu0 0
  %1546 = vmatprep.subr.bf16.mxu0 0
  %1547 = vmatpush1.bf16.xpose.msra.mxu0 0
  %1548 = vmatprep.subr.bf16.mxu0 0
  %1549 = vmatpush1.bf16.xpose.msra.mxu0 0
  %1550 = vmatprep.subr.bf16.mxu0 0
  %1551 = vmatpush1.bf16.xpose.msra.mxu0 0
  %1552 = vmatprep.subr.bf16.mxu0 0
  %1553 = vmatpush1.bf16.xpose.msra.mxu0 0
  %1554 = vmatprep.subr.bf16.mxu0 0
  %1555 = vmatpush1.bf16.xpose.msra.mxu0 0
  %1556 = vmatprep.subr.bf16.mxu0 0
  %1557 = vmatpush1.bf16.xpose.msra.mxu0 0
  %1558 = vmatprep.subr.bf16.mxu0 0
  %1559 = vmatpush1.bf16.xpose.msra.mxu0 0
  %1560 = vmatprep.mubr.bf16.mxu0 0
  %1561 = vmatmul.mubr.bf16.gmra.mrb[0].mxu0 %v1526
  %v1562 = vpop.f32.mrb[0].mxu0
  %v1563 = vadd.f32 0.0, %v1562
  %v1564 = vpop.f32.mrb[0].mxu0
  %v1565 = vpop.f32.mrb[0].mxu0
  %v1566 = vadd.f32 0.0, %v1565
  %v1567 = vpop.f32.mrb[0].mxu0
  %1568 = vmatprep.mubr.bf16.mxu0 0
  %1569 = vmatmul.mubr.bf16.gmra.mrb[0].mxu0 %v1527
  %v1570 = vpop.f32.mrb[0].mxu0
  %v1571 = vadd.f32 0.0, %v1570
  %v1572 = vpop.f32.mrb[0].mxu0
  %v1573 = vpop.f32.mrb[0].mxu0
  %v1574 = vadd.f32 0.0, %v1573
  %v1575 = vpop.f32.mrb[0].mxu0
  %1576 = vdwg.mxu0
  %v1577 = vpack.c.bf16 %v1566, %v1563
  %v1578 = vpack.c.bf16 %v1574, %v1571
  %v1579 = vpack.c.bf16 %v145, %v145
  %v1580 = vlaneseq
  %v1581 = vshrl.u32 %v1580, 7
  %v1582 = vadd.s32 %v1581, 8
  %v1583 = vadd.s32 %v1581, 16
  %v1584 = vadd.s32 %v1581, 24
  %v1585 = vld [vmem:[%s6] sm:$0x1]
  %v1586 = vld [vmem:[%s6 + $0x1] sm:$0x1]
  %v1587 = vlaneseq
  %v1588 = vshrl.u32 %v1587, 7
  %v1589 = vsub.s32 0, %v1588
  %v1590 = vrot.slane %v1585, %v1589
  %vm1591 = vcmp.eq.s32.totalorder %v1581, %v1590
  %vm1592 = vcmp.eq.s32.totalorder %v1582, %v1590
  %vm1593 = vcmp.eq.s32.totalorder %v1583, %v1590
  %vm1594 = vcmp.eq.s32.totalorder %v1584, %v1590
  %v1595 = vsel %vm1591, 1, 0
  %v1596 = vsel %vm1592, 1, 0
  %v1597 = vsel %vm1593, 1, 0
  %v1598 = vsel %vm1594, 1, 0
  %v1599 = vcvt.s32.f32 %v1595
  %v1600 = vcvt.s32.f32 %v1596
  %v1601 = vcvt.s32.f32 %v1597
  %v1602 = vcvt.s32.f32 %v1598
  %v1603 = vpack.c.bf16 %v1600, %v1599
  %v1604 = vpack.c.bf16 %v1602, %v1601
  %v1605 = vlaneseq
  %v1606 = vshrl.u32 %v1605, 7
  %v1607 = vsub.s32 0, %v1606
  %v1608 = vrot.slane %v1586, %v1607
  %vm1609 = vcmp.eq.s32.totalorder %v1581, %v1608
  %vm1610 = vcmp.eq.s32.totalorder %v1582, %v1608
  %vm1611 = vcmp.eq.s32.totalorder %v1583, %v1608
  %vm1612 = vcmp.eq.s32.totalorder %v1584, %v1608
  %v1613 = vsel %vm1609, 1, 0
  %v1614 = vsel %vm1610, 1, 0
  %v1615 = vsel %vm1611, 1, 0
  %v1616 = vsel %vm1612, 1, 0
  %v1617 = vcvt.s32.f32 %v1613
  %v1618 = vcvt.s32.f32 %v1614
  %v1619 = vcvt.s32.f32 %v1615
  %v1620 = vcvt.s32.f32 %v1616
  %v1621 = vpack.c.bf16 %v1618, %v1617
  %v1622 = vpack.c.bf16 %v1620, %v1619
  %vm1623 = vcmask 261120
  %v1625 = vsel %vm1623, %v1577, 0
  %v1628 = vsel %vm1623, %v1578, 0
  %1630 = vmatprep.subr.bf16.mxu0 0
  %1631 = vmatpush1.bf16.msra.mxu0 %v1621
  %1632 = vmatprep.subr.bf16.mxu0 0
  %1633 = vmatpush1.bf16.msra.mxu0 %v1622
  %1634 = vmatprep.subr.bf16.mxu0 0
  %1635 = vmatpush1.bf16.msra.mxu0 0
  %1636 = vmatprep.subr.bf16.mxu0 0
  %1637 = vmatpush1.bf16.msra.mxu0 0
  %1638 = vmatprep.subr.bf16.mxu0 0
  %1639 = vmatpush1.bf16.msra.mxu0 0
  %1640 = vmatprep.subr.bf16.mxu0 0
  %1641 = vmatpush1.bf16.msra.mxu0 0
  %1642 = vmatprep.subr.bf16.mxu0 0
  %1643 = vmatpush1.bf16.msra.mxu0 0
  %1644 = vmatprep.subr.bf16.mxu0 0
  %1645 = vmatpush1.bf16.msra.mxu0 0
  %1646 = vmatprep.subr.bf16.mxu0 0
  %1647 = vmatpush1.bf16.msra.mxu0 0
  %1648 = vmatprep.subr.bf16.mxu0 0
  %1649 = vmatpush1.bf16.msra.mxu0 0
  %1650 = vmatprep.subr.bf16.mxu0 0
  %1651 = vmatpush1.bf16.msra.mxu0 0
  %1652 = vmatprep.subr.bf16.mxu0 0
  %1653 = vmatpush1.bf16.msra.mxu0 0
  %1654 = vmatprep.subr.bf16.mxu0 0
  %1655 = vmatpush1.bf16.msra.mxu0 0
  %1656 = vmatprep.subr.bf16.mxu0 0
  %1657 = vmatpush1.bf16.msra.mxu0 0
  %1658 = vmatprep.subr.bf16.mxu0 0
  %1659 = vmatpush1.bf16.msra.mxu0 0
  %1660 = vmatprep.subr.bf16.mxu0 0
  %1661 = vmatpush1.bf16.msra.mxu0 0
  %1662 = vmatprep.mubr.bf16.mxu0 0
  %1663 = vmatmul.mubr.bf16.gmra.mrb[0].mxu0 %v1625
  %v1664 = vpop.f32.mrb[0].mxu0
  %v1665 = vadd.f32 0.0, %v1664
  %v1666 = vpop.f32.mrb[0].mxu0
  %v1667 = vpop.f32.mrb[0].mxu0
  %v1668 = vadd.f32 0.0, %v1667
  %v1669 = vpop.f32.mrb[0].mxu0
  %1670 = vmatprep.mubr.bf16.mxu0 0
  %1671 = vmatmul.mubr.bf16.gmra.mrb[0].mxu0 %v1628
  %v1672 = vpop.f32.mrb[0].mxu0
  %v1673 = vadd.f32 0.0, %v1672
  %v1674 = vpop.f32.mrb[0].mxu0
  %v1675 = vpop.f32.mrb[0].mxu0
  %v1676 = vadd.f32 0.0, %v1675
  %v1677 = vpop.f32.mrb[0].mxu0
  %1678 = vdwg.mxu0
  %v1679 = vpack.c.bf16 %v1668, %v1665
  %v1680 = vpack.c.bf16 %v1676, %v1673
  %v1681 = vmul.bf16 %v1603, %v1679
  %v1682 = vmul.bf16 %v1604, %v1680
  %v1683 = vadd.bf16 %v1603, %v1621
  %v1684 = vadd.bf16 %v1604, %v1622
  %v1686 = vsel %vm1623, %v1579, 0
  %1688 = vmatprep.subr.bf16.mxu0 0
  %1689 = vmatpush1.bf16.msra.mxu0 %v1683
  %1690 = vmatprep.subr.bf16.mxu0 0
  %1691 = vmatpush1.bf16.msra.mxu0 %v1684
  %1692 = vmatprep.subr.bf16.mxu0 0
  %1693 = vmatpush1.bf16.msra.mxu0 0
  %1694 = vmatprep.subr.bf16.mxu0 0
  %1695 = vmatpush1.bf16.msra.mxu0 0
  %1696 = vmatprep.subr.bf16.mxu0 0
  %1697 = vmatpush1.bf16.msra.mxu0 0
  %1698 = vmatprep.subr.bf16.mxu0 0
  %1699 = vmatpush1.bf16.msra.mxu0 0
  %1700 = vmatprep.subr.bf16.mxu0 0
  %1701 = vmatpush1.bf16.msra.mxu0 0
  %1702 = vmatprep.subr.bf16.mxu0 0
  %1703 = vmatpush1.bf16.msra.mxu0 0
  %1704 = vmatprep.subr.bf16.mxu0 0
  %1705 = vmatpush1.bf16.msra.mxu0 0
  %1706 = vmatprep.subr.bf16.mxu0 0
  %1707 = vmatpush1.bf16.msra.mxu0 0
  %1708 = vmatprep.subr.bf16.mxu0 0
  %1709 = vmatpush1.bf16.msra.mxu0 0
  %1710 = vmatprep.subr.bf16.mxu0 0
  %1711 = vmatpush1.bf16.msra.mxu0 0
  %1712 = vmatprep.subr.bf16.mxu0 0
  %1713 = vmatpush1.bf16.msra.mxu0 0
  %1714 = vmatprep.subr.bf16.mxu0 0
  %1715 = vmatpush1.bf16.msra.mxu0 0
  %1716 = vmatprep.subr.bf16.mxu0 0
  %1717 = vmatpush1.bf16.msra.mxu0 0
  %1718 = vmatprep.subr.bf16.mxu0 0
  %1719 = vmatpush1.bf16.msra.mxu0 0
  %1720 = vmatprep.mubr.bf16.mxu0 0
  %1721 = vmatmul.mubr.bf16.gmra.mrb[0].mxu0 %v1686
  %v1722 = vpop.f32.mrb[0].mxu0
  %v1723 = vadd.f32 0.0, %v1722
  %v1724 = vpop.f32.mrb[0].mxu0
  %v1725 = vpop.f32.mrb[0].mxu0
  %v1726 = vpop.f32.mrb[0].mxu0
  %1727 = vdwg.mxu0
  %v1729 = vsel %vm1623, 1065369472, 0
  %1731 = vmatprep.subr.bf16.mxu0 0
  %1732 = vmatpush1.bf16.msra.mxu0 %v1681
  %1733 = vmatprep.subr.bf16.mxu0 0
  %1734 = vmatpush1.bf16.msra.mxu0 %v1682
  %1735 = vmatprep.subr.bf16.mxu0 0
  %1736 = vmatpush1.bf16.msra.mxu0 0
  %1737 = vmatprep.subr.bf16.mxu0 0
  %1738 = vmatpush1.bf16.msra.mxu0 0
  %1739 = vmatprep.subr.bf16.mxu0 0
  %1740 = vmatpush1.bf16.msra.mxu0 0
  %1741 = vmatprep.subr.bf16.mxu0 0
  %1742 = vmatpush1.bf16.msra.mxu0 0
  %1743 = vmatprep.subr.bf16.mxu0 0
  %1744 = vmatpush1.bf16.msra.mxu0 0
  %1745 = vmatprep.subr.bf16.mxu0 0
  %1746 = vmatpush1.bf16.msra.mxu0 0
  %1747 = vmatprep.subr.bf16.mxu0 0
  %1748 = vmatpush1.bf16.msra.mxu0 0
  %1749 = vmatprep.subr.bf16.mxu0 0
  %1750 = vmatpush1.bf16.msra.mxu0 0
  %1751 = vmatprep.subr.bf16.mxu0 0
  %1752 = vmatpush1.bf16.msra.mxu0 0
  %1753 = vmatprep.subr.bf16.mxu0 0
  %1754 = vmatpush1.bf16.msra.mxu0 0
  %1755 = vmatprep.subr.bf16.mxu0 0
  %1756 = vmatpush1.bf16.msra.mxu0 0
  %1757 = vmatprep.subr.bf16.mxu0 0
  %1758 = vmatpush1.bf16.msra.mxu0 0
  %1759 = vmatprep.subr.bf16.mxu0 0
  %1760 = vmatpush1.bf16.msra.mxu0 0
  %1761 = vmatprep.subr.bf16.mxu0 0
  %1762 = vmatpush1.bf16.msra.mxu0 0
  %1763 = vmatprep.mubr.bf16.mxu0 0
  %1764 = vmatmul.mubr.bf16.gmra.mrb[0].mxu0 %v1729
  %v1765 = vpop.f32.mrb[0].mxu0
  %v1766 = vadd.f32 %v1723, %v1765
  %v1767 = vpop.f32.mrb[0].mxu0
  %v1768 = vpop.f32.mrb[0].mxu0
  %v1769 = vpop.f32.mrb[0].mxu0
  %1770 = vdwg.mxu0
  %v1771 = vld [vmem:[%s6 + $0x2] sm:$0x1]
  %v1772 = vld [vmem:[%s6 + $0x3] sm:$0x1]
  %v1773 = vlaneseq
  %v1774 = vshrl.u32 %v1773, 7
  %v1775 = vsub.s32 0, %v1774
  %v1776 = vrot.slane %v1771, %v1775
  %vm1777 = vcmp.eq.s32.totalorder %v1581, %v1776
  %vm1778 = vcmp.eq.s32.totalorder %v1582, %v1776
  %vm1779 = vcmp.eq.s32.totalorder %v1583, %v1776
  %vm1780 = vcmp.eq.s32.totalorder %v1584, %v1776
  %v1781 = vsel %vm1777, 1, 0
  %v1782 = vsel %vm1778, 1, 0
  %v1783 = vsel %vm1779, 1, 0
  %v1784 = vsel %vm1780, 1, 0
  %v1785 = vcvt.s32.f32 %v1781
  %v1786 = vcvt.s32.f32 %v1782
  %v1787 = vcvt.s32.f32 %v1783
  %v1788 = vcvt.s32.f32 %v1784
  %v1789 = vpack.c.bf16 %v1786, %v1785
  %v1790 = vpack.c.bf16 %v1788, %v1787
  %v1791 = vlaneseq
  %v1792 = vshrl.u32 %v1791, 7
  %v1793 = vsub.s32 0, %v1792
  %v1794 = vrot.slane %v1772, %v1793
  %vm1795 = vcmp.eq.s32.totalorder %v1581, %v1794
  %vm1796 = vcmp.eq.s32.totalorder %v1582, %v1794
  %vm1797 = vcmp.eq.s32.totalorder %v1583, %v1794
  %vm1798 = vcmp.eq.s32.totalorder %v1584, %v1794
  %v1799 = vsel %vm1795, 1, 0
  %v1800 = vsel %vm1796, 1, 0
  %v1801 = vsel %vm1797, 1, 0
  %v1802 = vsel %vm1798, 1, 0
  %v1803 = vcvt.s32.f32 %v1799
  %v1804 = vcvt.s32.f32 %v1800
  %v1805 = vcvt.s32.f32 %v1801
  %v1806 = vcvt.s32.f32 %v1802
  %v1807 = vpack.c.bf16 %v1804, %v1803
  %v1808 = vpack.c.bf16 %v1806, %v1805
  %1809 = vmatprep.subr.bf16.mxu0 0
  %1810 = vmatpush1.bf16.msra.mxu0 %v1807
  %1811 = vmatprep.subr.bf16.mxu0 0
  %1812 = vmatpush1.bf16.msra.mxu0 %v1808
  %1813 = vmatprep.subr.bf16.mxu0 0
  %1814 = vmatpush1.bf16.msra.mxu0 0
  %1815 = vmatprep.subr.bf16.mxu0 0
  %1816 = vmatpush1.bf16.msra.mxu0 0
  %1817 = vmatprep.subr.bf16.mxu0 0
  %1818 = vmatpush1.bf16.msra.mxu0 0
  %1819 = vmatprep.subr.bf16.mxu0 0
  %1820 = vmatpush1.bf16.msra.mxu0 0
  %1821 = vmatprep.subr.bf16.mxu0 0
  %1822 = vmatpush1.bf16.msra.mxu0 0
  %1823 = vmatprep.subr.bf16.mxu0 0
  %1824 = vmatpush1.bf16.msra.mxu0 0
  %1825 = vmatprep.subr.bf16.mxu0 0
  %1826 = vmatpush1.bf16.msra.mxu0 0
  %1827 = vmatprep.subr.bf16.mxu0 0
  %1828 = vmatpush1.bf16.msra.mxu0 0
  %1829 = vmatprep.subr.bf16.mxu0 0
  %1830 = vmatpush1.bf16.msra.mxu0 0
  %1831 = vmatprep.subr.bf16.mxu0 0
  %1832 = vmatpush1.bf16.msra.mxu0 0
  %1833 = vmatprep.subr.bf16.mxu0 0
  %1834 = vmatpush1.bf16.msra.mxu0 0
  %1835 = vmatprep.subr.bf16.mxu0 0
  %1836 = vmatpush1.bf16.msra.mxu0 0
  %1837 = vmatprep.subr.bf16.mxu0 0
  %1838 = vmatpush1.bf16.msra.mxu0 0
  %1839 = vmatprep.subr.bf16.mxu0 0
  %1840 = vmatpush1.bf16.msra.mxu0 0
  %1841 = vmatprep.mubr.bf16.mxu0 0
  %1842 = vmatmul.mubr.bf16.gmra.mrb[0].mxu0 %v1625
  %v1843 = vpop.f32.mrb[0].mxu0
  %v1844 = vadd.f32 0.0, %v1843
  %v1845 = vpop.f32.mrb[0].mxu0
  %v1846 = vpop.f32.mrb[0].mxu0
  %v1847 = vadd.f32 0.0, %v1846
  %v1848 = vpop.f32.mrb[0].mxu0
  %1849 = vmatprep.mubr.bf16.mxu0 0
  %1850 = vmatmul.mubr.bf16.gmra.mrb[0].mxu0 %v1628
  %v1851 = vpop.f32.mrb[0].mxu0
  %v1852 = vadd.f32 0.0, %v1851
  %v1853 = vpop.f32.mrb[0].mxu0
  %v1854 = vpop.f32.mrb[0].mxu0
  %v1855 = vadd.f32 0.0, %v1854
  %v1856 = vpop.f32.mrb[0].mxu0
  %1857 = vdwg.mxu0
  %v1858 = vpack.c.bf16 %v1847, %v1844
  %v1859 = vpack.c.bf16 %v1855, %v1852
  %v1860 = vmul.bf16 %v1789, %v1858
  %v1861 = vmul.bf16 %v1790, %v1859
  %v1862 = vadd.bf16 %v1789, %v1807
  %v1863 = vadd.bf16 %v1790, %v1808
  %1864 = vmatprep.subr.bf16.mxu0 0
  %1865 = vmatpush1.bf16.msra.mxu0 %v1862
  %1866 = vmatprep.subr.bf16.mxu0 0
  %1867 = vmatpush1.bf16.msra.mxu0 %v1863
  %1868 = vmatprep.subr.bf16.mxu0 0
  %1869 = vmatpush1.bf16.msra.mxu0 0
  %1870 = vmatprep.subr.bf16.mxu0 0
  %1871 = vmatpush1.bf16.msra.mxu0 0
  %1872 = vmatprep.subr.bf16.mxu0 0
  %1873 = vmatpush1.bf16.msra.mxu0 0
  %1874 = vmatprep.subr.bf16.mxu0 0
  %1875 = vmatpush1.bf16.msra.mxu0 0
  %1876 = vmatprep.subr.bf16.mxu0 0
  %1877 = vmatpush1.bf16.msra.mxu0 0
  %1878 = vmatprep.subr.bf16.mxu0 0
  %1879 = vmatpush1.bf16.msra.mxu0 0
  %1880 = vmatprep.subr.bf16.mxu0 0
  %1881 = vmatpush1.bf16.msra.mxu0 0
  %1882 = vmatprep.subr.bf16.mxu0 0
  %1883 = vmatpush1.bf16.msra.mxu0 0
  %1884 = vmatprep.subr.bf16.mxu0 0
  %1885 = vmatpush1.bf16.msra.mxu0 0
  %1886 = vmatprep.subr.bf16.mxu0 0
  %1887 = vmatpush1.bf16.msra.mxu0 0
  %1888 = vmatprep.subr.bf16.mxu0 0
  %1889 = vmatpush1.bf16.msra.mxu0 0
  %1890 = vmatprep.subr.bf16.mxu0 0
  %1891 = vmatpush1.bf16.msra.mxu0 0
  %1892 = vmatprep.subr.bf16.mxu0 0
  %1893 = vmatpush1.bf16.msra.mxu0 0
  %1894 = vmatprep.subr.bf16.mxu0 0
  %1895 = vmatpush1.bf16.msra.mxu0 0
  %1896 = vmatprep.mubr.bf16.mxu0 0
  %1897 = vmatmul.mubr.bf16.gmra.mrb[0].mxu0 %v1686
  %v1898 = vpop.f32.mrb[0].mxu0
  %v1899 = vadd.f32 0.0, %v1898
  %v1900 = vpop.f32.mrb[0].mxu0
  %v1901 = vpop.f32.mrb[0].mxu0
  %v1902 = vpop.f32.mrb[0].mxu0
  %1903 = vdwg.mxu0
  %1904 = vmatprep.subr.bf16.mxu0 0
  %1905 = vmatpush1.bf16.msra.mxu0 %v1860
  %1906 = vmatprep.subr.bf16.mxu0 0
  %1907 = vmatpush1.bf16.msra.mxu0 %v1861
  %1908 = vmatprep.subr.bf16.mxu0 0
  %1909 = vmatpush1.bf16.msra.mxu0 0
  %1910 = vmatprep.subr.bf16.mxu0 0
  %1911 = vmatpush1.bf16.msra.mxu0 0
  %1912 = vmatprep.subr.bf16.mxu0 0
  %1913 = vmatpush1.bf16.msra.mxu0 0
  %1914 = vmatprep.subr.bf16.mxu0 0
  %1915 = vmatpush1.bf16.msra.mxu0 0
  %1916 = vmatprep.subr.bf16.mxu0 0
  %1917 = vmatpush1.bf16.msra.mxu0 0
  %1918 = vmatprep.subr.bf16.mxu0 0
  %1919 = vmatpush1.bf16.msra.mxu0 0
  %1920 = vmatprep.subr.bf16.mxu0 0
  %1921 = vmatpush1.bf16.msra.mxu0 0
  %1922 = vmatprep.subr.bf16.mxu0 0
  %1923 = vmatpush1.bf16.msra.mxu0 0
  %1924 = vmatprep.subr.bf16.mxu0 0
  %1925 = vmatpush1.bf16.msra.mxu0 0
  %1926 = vmatprep.subr.bf16.mxu0 0
  %1927 = vmatpush1.bf16.msra.mxu0 0
  %1928 = vmatprep.subr.bf16.mxu0 0
  %1929 = vmatpush1.bf16.msra.mxu0 0
  %1930 = vmatprep.subr.bf16.mxu0 0
  %1931 = vmatpush1.bf16.msra.mxu0 0
  %1932 = vmatprep.subr.bf16.mxu0 0
  %1933 = vmatpush1.bf16.msra.mxu0 0
  %1934 = vmatprep.subr.bf16.mxu0 0
  %1935 = vmatpush1.bf16.msra.mxu0 0
  %1936 = vmatprep.mubr.bf16.mxu0 0
  %1937 = vmatmul.mubr.bf16.gmra.mrb[0].mxu0 %v1729
  %v1938 = vpop.f32.mrb[0].mxu0
  %v1939 = vadd.f32 %v1899, %v1938
  %v1940 = vpop.f32.mrb[0].mxu0
  %v1941 = vpop.f32.mrb[0].mxu0
  %v1942 = vpop.f32.mrb[0].mxu0
  %1943 = vdwg.mxu0
  %v1944 = vsub.f32 %v1939, %v1766
  %v1945 = vadd.f32 %v1944, 1.0
  %v1946 = vmax.f32 %v1945, 0.0
  %vm1947 = vcmp.ge.s32.totalorder %v1585, 0
  %v1948 = vsel %vm1947, %v1946, 0.0
  %1949 = vst [vmem:[%s7] sm:$0x1] %v1948
  // Predicated region
  $region30: #{pinsage_forward.1} parent=0 // pred_check
    _
  $region31: #{pinsage_forward.1} parent=0 // pred_check_branch
    %1951 = sbr.rel (0) target = $region33
  $region32: #{pinsage_forward.1} parent=0 // pred_region
    _
  $region33: #{pinsage_forward.1} parent=0 // pred_fallthru
    _
  // Predicated region
  $region34: #{pinsage_forward.1} parent=0 // pred_check
    _
  $region35: #{pinsage_forward.1} parent=0 // pred_check_branch
    %1953 = sbr.rel (0) target = $region37
  $region36: #{pinsage_forward.1} parent=0 // pred_region
    _
  $region37: #{pinsage_forward.1} parent=0 // pred_fallthru
    _

</llo_original>
